<compile_context>
chip_gen: v6e
topology: v6e:2x2x1
jax: 0.10.0
libtpu: 0.0.40
codegen_flags: <defaults>
</compile_context>

<pallas_src>
import jax
import jax.numpy as jnp
from jax.experimental import pallas as pl
from jax.experimental.pallas import tpu as pltpu

_BN_EPS = 1e-5


# ----------------------------------------------------------------------------
# Fused whole-network kernel
# ----------------------------------------------------------------------------
def _make_fused_kernel(num_unroll):
    """Builds a kernel computing the full unrolled ResNet chain in VMEM.

    Flat ref order (all whole-array VMEM refs):
      x,
      per in-stack : w_in, b_in, gamma, beta, w_out, b_out        (6 each)
      interm       : w_in, b_in, gamma, beta, w1, b1, w0, b0      (8)
      per out-stack: w_in, b_in, gamma, beta, w_out, b_out        (6 each)
      o  (output)
    """

    def kernel(*refs):
        o_ref = refs[-1]
        it = iter(refs[:-1])

        x = next(it)[...].astype(jnp.float32)

        def dense(a, w_ref, b_ref):
            return (jnp.dot(a, w_ref[...].astype(jnp.float32),
                            preferred_element_type=jnp.float32)
                    + b_ref[...].astype(jnp.float32))

        def bn_relu(z, g_ref, beta_ref):
            # Training-mode BN over the (whole, untiled) batch axis; folded into
            # a single scale/shift followed by relu.
            mean = jnp.mean(z, axis=0, keepdims=True)
            var = jnp.mean(jnp.square(z - mean), axis=0, keepdims=True)
            scale = g_ref[...].astype(jnp.float32) * jax.lax.rsqrt(var + _BN_EPS)
            shift = beta_ref[...].astype(jnp.float32) - mean * scale
            return jnp.maximum(z * scale + shift, 0.0)

        def res_stack(x):
            w_in, b_in, g, bt, w_out, b_out = (next(it) for _ in range(6))
            h = bn_relu(dense(x, w_in, b_in), g, bt)
            return jnp.maximum(x + dense(h, w_out, b_out), 0.0)

        # "in" stacks
        for _ in range(num_unroll):
            x = res_stack(x)

        # interm stack: both GEMMs summed in one expression (single epilogue).
        w_in, b_in, g, bt, w1, b1, w0, b0 = (next(it) for _ in range(8))
        h = bn_relu(dense(x, w_in, b_in), g, bt)
        y = (jnp.dot(x, w1[...].astype(jnp.float32),
                     preferred_element_type=jnp.float32)
             + jnp.dot(h, w0[...].astype(jnp.float32),
                       preferred_element_type=jnp.float32)
             + b1[...].astype(jnp.float32) + b0[...].astype(jnp.float32))
        x = jnp.maximum(y, 0.0)

        # "out" stacks
        for _ in range(num_unroll):
            x = res_stack(x)

        o_ref[...] = x.astype(o_ref.dtype)

    return kernel


def _flatten_params(params):
    def r1(v):  # biases / BN params as lane-major (1, D) rows
        return v.reshape(1, -1)

    flat = []
    for p in params["in_stacks"]:
        flat += [p["w_in"], r1(p["b_in"]), r1(p["gamma"]), r1(p["beta"]),
                 p["w_out"], r1(p["b_out"])]
    q = params["interm"]
    flat += [q["w_in"], r1(q["b_in"]), r1(q["gamma"]), r1(q["beta"]),
             q["w1"], r1(q["b1"]), q["w0"], r1(q["b0"])]
    for p in params["out_stacks"]:
        flat += [p["w_in"], r1(p["b_in"]), r1(p["gamma"]), r1(p["beta"]),
                 p["w_out"], r1(p["b_out"])]
    return flat


def unroll_net_forward(params, x):
    num_unroll = len(params["in_stacks"])
    fc_size = params["interm"]["w0"].shape[1]
    batch = x.shape[0]

    args = [x] + _flatten_params(params)
    kernel = _make_fused_kernel(num_unroll)

    # Conservative VMEM budget: all resident params/activations + headroom,
    # capped well under v7x's 64 MiB physical VMEM.
    total_bytes = sum(int(a.size) * a.dtype.itemsize for a in args)
    vmem_limit = int(min(max(2 * total_bytes + (8 << 20), 16 << 20), 48 << 20))

    vmem_spec = pl.BlockSpec(memory_space=pltpu.MemorySpace.VMEM)
    return pl.pallas_call(
        kernel,
        out_shape=jax.ShapeDtypeStruct((batch, fc_size), x.dtype),
        in_specs=[vmem_spec] * len(args),
        out_specs=vmem_spec,
        compiler_params=pltpu.CompilerParams(vmem_limit_bytes=vmem_limit),
    )(*args)


# ----------------------------------------------------------------------------
# Parameter init (PyTorch-style Linear init; BN affine params slightly randomized)
# ----------------------------------------------------------------------------
def _linear_init(key, d_in, d_out):
    kw, kb = jax.random.split(key)
    bound = float(d_in) ** -0.5
    w = jax.random.uniform(kw, (d_in, d_out), jnp.float32, -bound, bound)
    b = jax.random.uniform(kb, (d_out,), jnp.float32, -bound, bound)
    return w, b


def _bn_init(key, d):
    kg, kb = jax.random.split(key)
    gamma = jax.random.uniform(kg, (d,), jnp.float32, 0.8, 1.2)
    beta = 0.1 * jax.random.normal(kb, (d,), jnp.float32)
    return gamma, beta


def _stack_init(key, d):
    k1, k2, k3 = jax.random.split(key, 3)
    w_in, b_in = _linear_init(k1, d, d)
    w_out, b_out = _linear_init(k2, d, d)
    gamma, beta = _bn_init(k3, d)
    return dict(w_in=w_in, b_in=b_in, gamma=gamma, beta=beta,
                w_out=w_out, b_out=b_out)


def _interm_init(key, d, f):
    k1, k2, k3, k4 = jax.random.split(key, 4)
    w_in, b_in = _linear_init(k1, d, d)
    w0, b0 = _linear_init(k2, d, f)
    w1, b1 = _linear_init(k3, d, f)
    gamma, beta = _bn_init(k4, d)
    return dict(w_in=w_in, b_in=b_in, gamma=gamma, beta=beta,
                w0=w0, b0=b0, w1=w1, b1=b1)


def init_params(key, num_unroll, input_size, fc_size):
    keys = jax.random.split(key, 2 * num_unroll + 1)
    return dict(
        in_stacks=[_stack_init(keys[i], input_size) for i in range(num_unroll)],
        interm=_interm_init(keys[num_unroll], input_size, fc_size),
        out_stacks=[_stack_init(keys[num_unroll + 1 + i], fc_size)
                    for i in range(num_unroll)],
    )


# ----------------------------------------------------------------------------
# Pure-JAX reference (same math, high-precision matmuls)
# ----------------------------------------------------------------------------
def _bn_ref(z, gamma, beta):
    mean = jnp.mean(z, axis=0, keepdims=True)
    var = jnp.mean(jnp.square(z - mean), axis=0, keepdims=True)
    return (z - mean) / jnp.sqrt(var + _BN_EPS) * gamma + beta


def _mm(a, b):
    return jnp.dot(a, b, precision=jax.lax.Precision.HIGHEST)


def reference_forward(params, x):
    def stack(x, p):
        h = jax.nn.relu(_bn_ref(_mm(x, p["w_in"]) + p["b_in"], p["gamma"], p["beta"]))
        return jax.nn.relu(x + _mm(h, p["w_out"]) + p["b_out"])

    def interm(x, p):
        h = jax.nn.relu(_bn_ref(_mm(x, p["w_in"]) + p["b_in"], p["gamma"], p["beta"]))
        return jax.nn.relu(_mm(x, p["w1"]) + p["b1"] + _mm(h, p["w0"]) + p["b0"])

    for p in params["in_stacks"]:
        x = stack(x, p)
    x = interm(x, params["interm"])
    for p in params["out_stacks"]:
        x = stack(x, p)
    return x


# ----------------------------------------------------------------------------
if __name__ == "__main__":
    key = jax.random.PRNGKey(0)
    k_x, k_p = jax.random.split(key)

    # Small, TPU-aligned shapes consistent with the module's forward:
    # batch=8 (sublane-aligned), input_size=256, fc_size=128, num_unroll=2.
    num_unroll, batch, input_size, fc_size = 2, 8, 256, 128

    x = jax.random.uniform(k_x, (batch, input_size), dtype=jnp.float32)
    params = init_params(k_p, num_unroll, input_size, fc_size)

    fwd = jax.jit(unroll_net_forward)
    y = jax.block_until_ready(fwd(params, x))

    y_ref = reference_forward(params, x)
    assert y.shape == (batch, fc_size), y.shape
    max_diff = float(jnp.max(jnp.abs(y - y_ref)))
    assert jnp.allclose(y, y_ref, rtol=1e-2, atol=1e-2), max_diff

    print("KERNEL_OK")
</pallas_src>

<mosaic_0001>
module attributes {stable_mosaic.version = 11 : i64} {
  func.func @kernel(%arg0: memref<8x256xf32, #tpu.memory_space<vmem>>, %arg1: memref<256x256xf32, #tpu.memory_space<vmem>>, %arg2: memref<1x256xf32, #tpu.memory_space<vmem>>, %arg3: memref<1x256xf32, #tpu.memory_space<vmem>>, %arg4: memref<1x256xf32, #tpu.memory_space<vmem>>, %arg5: memref<256x256xf32, #tpu.memory_space<vmem>>, %arg6: memref<1x256xf32, #tpu.memory_space<vmem>>, %arg7: memref<256x256xf32, #tpu.memory_space<vmem>>, %arg8: memref<1x256xf32, #tpu.memory_space<vmem>>, %arg9: memref<1x256xf32, #tpu.memory_space<vmem>>, %arg10: memref<1x256xf32, #tpu.memory_space<vmem>>, %arg11: memref<256x256xf32, #tpu.memory_space<vmem>>, %arg12: memref<1x256xf32, #tpu.memory_space<vmem>>, %arg13: memref<256x256xf32, #tpu.memory_space<vmem>>, %arg14: memref<1x256xf32, #tpu.memory_space<vmem>>, %arg15: memref<1x256xf32, #tpu.memory_space<vmem>>, %arg16: memref<1x256xf32, #tpu.memory_space<vmem>>, %arg17: memref<256x128xf32, #tpu.memory_space<vmem>>, %arg18: memref<1x128xf32, #tpu.memory_space<vmem>>, %arg19: memref<256x128xf32, #tpu.memory_space<vmem>>, %arg20: memref<1x128xf32, #tpu.memory_space<vmem>>, %arg21: memref<128x128xf32, #tpu.memory_space<vmem>>, %arg22: memref<1x128xf32, #tpu.memory_space<vmem>>, %arg23: memref<1x128xf32, #tpu.memory_space<vmem>>, %arg24: memref<1x128xf32, #tpu.memory_space<vmem>>, %arg25: memref<128x128xf32, #tpu.memory_space<vmem>>, %arg26: memref<1x128xf32, #tpu.memory_space<vmem>>, %arg27: memref<128x128xf32, #tpu.memory_space<vmem>>, %arg28: memref<1x128xf32, #tpu.memory_space<vmem>>, %arg29: memref<1x128xf32, #tpu.memory_space<vmem>>, %arg30: memref<1x128xf32, #tpu.memory_space<vmem>>, %arg31: memref<128x128xf32, #tpu.memory_space<vmem>>, %arg32: memref<1x128xf32, #tpu.memory_space<vmem>>, %arg33: memref<8x128xf32, #tpu.memory_space<vmem>>) attributes {dimension_semantics = [], scalar_prefetch = 0 : i64, scratch_operands = 0 : i64, tpu.core_type = #tpu.core_type<tc>} {
    %c0 = arith.constant 0 : index
    %c0_0 = arith.constant 0 : index
    %0 = vector.load %arg0[%c0, %c0_0] : memref<8x256xf32, #tpu.memory_space<vmem>>, vector<8x256xf32>
    %c0_1 = arith.constant 0 : index
    %c0_2 = arith.constant 0 : index
    %1 = vector.load %arg1[%c0_1, %c0_2] : memref<256x256xf32, #tpu.memory_space<vmem>>, vector<256x256xf32>
    %cst = arith.constant dense<0.000000e+00> : vector<8x256xf32>
    %2 = tpu.matmul %0, %1, %cst {dimension_numbers = #tpu.dot_dimension_numbers<[1], [0], [0], [1], [0, 0, 1, 1], [], []>} : vector<8x256xf32>, vector<256x256xf32>, vector<8x256xf32> -> vector<8x256xf32>
    %c0_3 = arith.constant 0 : index
    %c0_4 = arith.constant 0 : index
    %3 = vector.load %arg2[%c0_3, %c0_4] : memref<1x256xf32, #tpu.memory_space<vmem>>, vector<1x256xf32>
    %4 = vector.broadcast %3 : vector<1x256xf32> to vector<8x256xf32>
    %5 = arith.addf %2, %4 : vector<8x256xf32>
    %cst_5 = arith.constant dense<0.000000e+00> : vector<256xf32>
    %6 = vector.multi_reduction <add>, %5, %cst_5 [0] : vector<8x256xf32> to vector<256xf32>
    %7 = vector.shape_cast %6 : vector<256xf32> to vector<1x256xf32>
    %cst_6 = arith.constant 8.000000e+00 : f32
    %8 = vector.broadcast %cst_6 : f32 to vector<1x256xf32>
    %9 = arith.divf %7, %8 : vector<1x256xf32>
    %10 = vector.broadcast %9 : vector<1x256xf32> to vector<8x256xf32>
    %11 = arith.subf %5, %10 : vector<8x256xf32>
    %12 = arith.mulf %11, %11 : vector<8x256xf32>
    %cst_7 = arith.constant dense<0.000000e+00> : vector<256xf32>
    %13 = vector.multi_reduction <add>, %12, %cst_7 [0] : vector<8x256xf32> to vector<256xf32>
    %14 = vector.shape_cast %13 : vector<256xf32> to vector<1x256xf32>
    %cst_8 = arith.constant 8.000000e+00 : f32
    %15 = vector.broadcast %cst_8 : f32 to vector<1x256xf32>
    %16 = arith.divf %14, %15 : vector<1x256xf32>
    %c0_9 = arith.constant 0 : index
    %c0_10 = arith.constant 0 : index
    %17 = vector.load %arg3[%c0_9, %c0_10] : memref<1x256xf32, #tpu.memory_space<vmem>>, vector<1x256xf32>
    %cst_11 = arith.constant 9.99999974E-6 : f32
    %18 = vector.broadcast %cst_11 : f32 to vector<1x256xf32>
    %19 = arith.addf %16, %18 : vector<1x256xf32>
    %20 = math.rsqrt %19 : vector<1x256xf32>
    %21 = arith.mulf %17, %20 : vector<1x256xf32>
    %c0_12 = arith.constant 0 : index
    %c0_13 = arith.constant 0 : index
    %22 = vector.load %arg4[%c0_12, %c0_13] : memref<1x256xf32, #tpu.memory_space<vmem>>, vector<1x256xf32>
    %23 = arith.mulf %9, %21 : vector<1x256xf32>
    %24 = arith.subf %22, %23 : vector<1x256xf32>
    %25 = vector.broadcast %21 : vector<1x256xf32> to vector<8x256xf32>
    %26 = arith.mulf %5, %25 : vector<8x256xf32>
    %27 = vector.broadcast %24 : vector<1x256xf32> to vector<8x256xf32>
    %28 = arith.addf %26, %27 : vector<8x256xf32>
    %cst_14 = arith.constant 0.000000e+00 : f32
    %29 = vector.broadcast %cst_14 : f32 to vector<8x256xf32>
    %30 = arith.maximumf %28, %29 : vector<8x256xf32>
    %c0_15 = arith.constant 0 : index
    %c0_16 = arith.constant 0 : index
    %31 = vector.load %arg5[%c0_15, %c0_16] : memref<256x256xf32, #tpu.memory_space<vmem>>, vector<256x256xf32>
    %cst_17 = arith.constant dense<0.000000e+00> : vector<8x256xf32>
    %32 = tpu.matmul %30, %31, %cst_17 {dimension_numbers = #tpu.dot_dimension_numbers<[1], [0], [0], [1], [0, 0, 1, 1], [], []>} : vector<8x256xf32>, vector<256x256xf32>, vector<8x256xf32> -> vector<8x256xf32>
    %c0_18 = arith.constant 0 : index
    %c0_19 = arith.constant 0 : index
    %33 = vector.load %arg6[%c0_18, %c0_19] : memref<1x256xf32, #tpu.memory_space<vmem>>, vector<1x256xf32>
    %34 = vector.broadcast %33 : vector<1x256xf32> to vector<8x256xf32>
    %35 = arith.addf %32, %34 : vector<8x256xf32>
    %36 = arith.addf %0, %35 : vector<8x256xf32>
    %cst_20 = arith.constant 0.000000e+00 : f32
    %37 = vector.broadcast %cst_20 : f32 to vector<8x256xf32>
    %38 = arith.maximumf %36, %37 : vector<8x256xf32>
    %c0_21 = arith.constant 0 : index
    %c0_22 = arith.constant 0 : index
    %39 = vector.load %arg7[%c0_21, %c0_22] : memref<256x256xf32, #tpu.memory_space<vmem>>, vector<256x256xf32>
    %cst_23 = arith.constant dense<0.000000e+00> : vector<8x256xf32>
    %40 = tpu.matmul %38, %39, %cst_23 {dimension_numbers = #tpu.dot_dimension_numbers<[1], [0], [0], [1], [0, 0, 1, 1], [], []>} : vector<8x256xf32>, vector<256x256xf32>, vector<8x256xf32> -> vector<8x256xf32>
    %c0_24 = arith.constant 0 : index
    %c0_25 = arith.constant 0 : index
    %41 = vector.load %arg8[%c0_24, %c0_25] : memref<1x256xf32, #tpu.memory_space<vmem>>, vector<1x256xf32>
    %42 = vector.broadcast %41 : vector<1x256xf32> to vector<8x256xf32>
    %43 = arith.addf %40, %42 : vector<8x256xf32>
    %cst_26 = arith.constant dense<0.000000e+00> : vector<256xf32>
    %44 = vector.multi_reduction <add>, %43, %cst_26 [0] : vector<8x256xf32> to vector<256xf32>
    %45 = vector.shape_cast %44 : vector<256xf32> to vector<1x256xf32>
    %cst_27 = arith.constant 8.000000e+00 : f32
    %46 = vector.broadcast %cst_27 : f32 to vector<1x256xf32>
    %47 = arith.divf %45, %46 : vector<1x256xf32>
    %48 = vector.broadcast %47 : vector<1x256xf32> to vector<8x256xf32>
    %49 = arith.subf %43, %48 : vector<8x256xf32>
    %50 = arith.mulf %49, %49 : vector<8x256xf32>
    %cst_28 = arith.constant dense<0.000000e+00> : vector<256xf32>
    %51 = vector.multi_reduction <add>, %50, %cst_28 [0] : vector<8x256xf32> to vector<256xf32>
    %52 = vector.shape_cast %51 : vector<256xf32> to vector<1x256xf32>
    %cst_29 = arith.constant 8.000000e+00 : f32
    %53 = vector.broadcast %cst_29 : f32 to vector<1x256xf32>
    %54 = arith.divf %52, %53 : vector<1x256xf32>
    %c0_30 = arith.constant 0 : index
    %c0_31 = arith.constant 0 : index
    %55 = vector.load %arg9[%c0_30, %c0_31] : memref<1x256xf32, #tpu.memory_space<vmem>>, vector<1x256xf32>
    %cst_32 = arith.constant 9.99999974E-6 : f32
    %56 = vector.broadcast %cst_32 : f32 to vector<1x256xf32>
    %57 = arith.addf %54, %56 : vector<1x256xf32>
    %58 = math.rsqrt %57 : vector<1x256xf32>
    %59 = arith.mulf %55, %58 : vector<1x256xf32>
    %c0_33 = arith.constant 0 : index
    %c0_34 = arith.constant 0 : index
    %60 = vector.load %arg10[%c0_33, %c0_34] : memref<1x256xf32, #tpu.memory_space<vmem>>, vector<1x256xf32>
    %61 = arith.mulf %47, %59 : vector<1x256xf32>
    %62 = arith.subf %60, %61 : vector<1x256xf32>
    %63 = vector.broadcast %59 : vector<1x256xf32> to vector<8x256xf32>
    %64 = arith.mulf %43, %63 : vector<8x256xf32>
    %65 = vector.broadcast %62 : vector<1x256xf32> to vector<8x256xf32>
    %66 = arith.addf %64, %65 : vector<8x256xf32>
    %cst_35 = arith.constant 0.000000e+00 : f32
    %67 = vector.broadcast %cst_35 : f32 to vector<8x256xf32>
    %68 = arith.maximumf %66, %67 : vector<8x256xf32>
    %c0_36 = arith.constant 0 : index
    %c0_37 = arith.constant 0 : index
    %69 = vector.load %arg11[%c0_36, %c0_37] : memref<256x256xf32, #tpu.memory_space<vmem>>, vector<256x256xf32>
    %cst_38 = arith.constant dense<0.000000e+00> : vector<8x256xf32>
    %70 = tpu.matmul %68, %69, %cst_38 {dimension_numbers = #tpu.dot_dimension_numbers<[1], [0], [0], [1], [0, 0, 1, 1], [], []>} : vector<8x256xf32>, vector<256x256xf32>, vector<8x256xf32> -> vector<8x256xf32>
    %c0_39 = arith.constant 0 : index
    %c0_40 = arith.constant 0 : index
    %71 = vector.load %arg12[%c0_39, %c0_40] : memref<1x256xf32, #tpu.memory_space<vmem>>, vector<1x256xf32>
    %72 = vector.broadcast %71 : vector<1x256xf32> to vector<8x256xf32>
    %73 = arith.addf %70, %72 : vector<8x256xf32>
    %74 = arith.addf %38, %73 : vector<8x256xf32>
    %cst_41 = arith.constant 0.000000e+00 : f32
    %75 = vector.broadcast %cst_41 : f32 to vector<8x256xf32>
    %76 = arith.maximumf %74, %75 : vector<8x256xf32>
    %c0_42 = arith.constant 0 : index
    %c0_43 = arith.constant 0 : index
    %77 = vector.load %arg13[%c0_42, %c0_43] : memref<256x256xf32, #tpu.memory_space<vmem>>, vector<256x256xf32>
    %cst_44 = arith.constant dense<0.000000e+00> : vector<8x256xf32>
    %78 = tpu.matmul %76, %77, %cst_44 {dimension_numbers = #tpu.dot_dimension_numbers<[1], [0], [0], [1], [0, 0, 1, 1], [], []>} : vector<8x256xf32>, vector<256x256xf32>, vector<8x256xf32> -> vector<8x256xf32>
    %c0_45 = arith.constant 0 : index
    %c0_46 = arith.constant 0 : index
    %79 = vector.load %arg14[%c0_45, %c0_46] : memref<1x256xf32, #tpu.memory_space<vmem>>, vector<1x256xf32>
    %80 = vector.broadcast %79 : vector<1x256xf32> to vector<8x256xf32>
    %81 = arith.addf %78, %80 : vector<8x256xf32>
    %cst_47 = arith.constant dense<0.000000e+00> : vector<256xf32>
    %82 = vector.multi_reduction <add>, %81, %cst_47 [0] : vector<8x256xf32> to vector<256xf32>
    %83 = vector.shape_cast %82 : vector<256xf32> to vector<1x256xf32>
    %cst_48 = arith.constant 8.000000e+00 : f32
    %84 = vector.broadcast %cst_48 : f32 to vector<1x256xf32>
    %85 = arith.divf %83, %84 : vector<1x256xf32>
    %86 = vector.broadcast %85 : vector<1x256xf32> to vector<8x256xf32>
    %87 = arith.subf %81, %86 : vector<8x256xf32>
    %88 = arith.mulf %87, %87 : vector<8x256xf32>
    %cst_49 = arith.constant dense<0.000000e+00> : vector<256xf32>
    %89 = vector.multi_reduction <add>, %88, %cst_49 [0] : vector<8x256xf32> to vector<256xf32>
    %90 = vector.shape_cast %89 : vector<256xf32> to vector<1x256xf32>
    %cst_50 = arith.constant 8.000000e+00 : f32
    %91 = vector.broadcast %cst_50 : f32 to vector<1x256xf32>
    %92 = arith.divf %90, %91 : vector<1x256xf32>
    %c0_51 = arith.constant 0 : index
    %c0_52 = arith.constant 0 : index
    %93 = vector.load %arg15[%c0_51, %c0_52] : memref<1x256xf32, #tpu.memory_space<vmem>>, vector<1x256xf32>
    %cst_53 = arith.constant 9.99999974E-6 : f32
    %94 = vector.broadcast %cst_53 : f32 to vector<1x256xf32>
    %95 = arith.addf %92, %94 : vector<1x256xf32>
    %96 = math.rsqrt %95 : vector<1x256xf32>
    %97 = arith.mulf %93, %96 : vector<1x256xf32>
    %c0_54 = arith.constant 0 : index
    %c0_55 = arith.constant 0 : index
    %98 = vector.load %arg16[%c0_54, %c0_55] : memref<1x256xf32, #tpu.memory_space<vmem>>, vector<1x256xf32>
    %99 = arith.mulf %85, %97 : vector<1x256xf32>
    %100 = arith.subf %98, %99 : vector<1x256xf32>
    %101 = vector.broadcast %97 : vector<1x256xf32> to vector<8x256xf32>
    %102 = arith.mulf %81, %101 : vector<8x256xf32>
    %103 = vector.broadcast %100 : vector<1x256xf32> to vector<8x256xf32>
    %104 = arith.addf %102, %103 : vector<8x256xf32>
    %cst_56 = arith.constant 0.000000e+00 : f32
    %105 = vector.broadcast %cst_56 : f32 to vector<8x256xf32>
    %106 = arith.maximumf %104, %105 : vector<8x256xf32>
    %c0_57 = arith.constant 0 : index
    %c0_58 = arith.constant 0 : index
    %107 = vector.load %arg17[%c0_57, %c0_58] : memref<256x128xf32, #tpu.memory_space<vmem>>, vector<256x128xf32>
    %cst_59 = arith.constant dense<0.000000e+00> : vector<8x128xf32>
    %108 = tpu.matmul %76, %107, %cst_59 {dimension_numbers = #tpu.dot_dimension_numbers<[1], [0], [0], [1], [0, 0, 1, 1], [], []>} : vector<8x256xf32>, vector<256x128xf32>, vector<8x128xf32> -> vector<8x128xf32>
    %c0_60 = arith.constant 0 : index
    %c0_61 = arith.constant 0 : index
    %109 = vector.load %arg19[%c0_60, %c0_61] : memref<256x128xf32, #tpu.memory_space<vmem>>, vector<256x128xf32>
    %cst_62 = arith.constant dense<0.000000e+00> : vector<8x128xf32>
    %110 = tpu.matmul %106, %109, %cst_62 {dimension_numbers = #tpu.dot_dimension_numbers<[1], [0], [0], [1], [0, 0, 1, 1], [], []>} : vector<8x256xf32>, vector<256x128xf32>, vector<8x128xf32> -> vector<8x128xf32>
    %111 = arith.addf %108, %110 : vector<8x128xf32>
    %c0_63 = arith.constant 0 : index
    %c0_64 = arith.constant 0 : index
    %112 = vector.load %arg18[%c0_63, %c0_64] : memref<1x128xf32, #tpu.memory_space<vmem>>, vector<1x128xf32>
    %113 = vector.broadcast %112 : vector<1x128xf32> to vector<8x128xf32>
    %114 = arith.addf %111, %113 : vector<8x128xf32>
    %c0_65 = arith.constant 0 : index
    %c0_66 = arith.constant 0 : index
    %115 = vector.load %arg20[%c0_65, %c0_66] : memref<1x128xf32, #tpu.memory_space<vmem>>, vector<1x128xf32>
    %116 = vector.broadcast %115 : vector<1x128xf32> to vector<8x128xf32>
    %117 = arith.addf %114, %116 : vector<8x128xf32>
    %cst_67 = arith.constant 0.000000e+00 : f32
    %118 = vector.broadcast %cst_67 : f32 to vector<8x128xf32>
    %119 = arith.maximumf %117, %118 : vector<8x128xf32>
    %c0_68 = arith.constant 0 : index
    %c0_69 = arith.constant 0 : index
    %120 = vector.load %arg21[%c0_68, %c0_69] : memref<128x128xf32, #tpu.memory_space<vmem>>, vector<128x128xf32>
    %cst_70 = arith.constant dense<0.000000e+00> : vector<8x128xf32>
    %121 = tpu.matmul %119, %120, %cst_70 {dimension_numbers = #tpu.dot_dimension_numbers<[1], [0], [0], [1], [0, 0, 1, 1], [], []>} : vector<8x128xf32>, vector<128x128xf32>, vector<8x128xf32> -> vector<8x128xf32>
    %c0_71 = arith.constant 0 : index
    %c0_72 = arith.constant 0 : index
    %122 = vector.load %arg22[%c0_71, %c0_72] : memref<1x128xf32, #tpu.memory_space<vmem>>, vector<1x128xf32>
    %123 = vector.broadcast %122 : vector<1x128xf32> to vector<8x128xf32>
    %124 = arith.addf %121, %123 : vector<8x128xf32>
    %cst_73 = arith.constant dense<0.000000e+00> : vector<128xf32>
    %125 = vector.multi_reduction <add>, %124, %cst_73 [0] : vector<8x128xf32> to vector<128xf32>
    %126 = vector.shape_cast %125 : vector<128xf32> to vector<1x128xf32>
    %cst_74 = arith.constant 8.000000e+00 : f32
    %127 = vector.broadcast %cst_74 : f32 to vector<1x128xf32>
    %128 = arith.divf %126, %127 : vector<1x128xf32>
    %129 = vector.broadcast %128 : vector<1x128xf32> to vector<8x128xf32>
    %130 = arith.subf %124, %129 : vector<8x128xf32>
    %131 = arith.mulf %130, %130 : vector<8x128xf32>
    %cst_75 = arith.constant dense<0.000000e+00> : vector<128xf32>
    %132 = vector.multi_reduction <add>, %131, %cst_75 [0] : vector<8x128xf32> to vector<128xf32>
    %133 = vector.shape_cast %132 : vector<128xf32> to vector<1x128xf32>
    %cst_76 = arith.constant 8.000000e+00 : f32
    %134 = vector.broadcast %cst_76 : f32 to vector<1x128xf32>
    %135 = arith.divf %133, %134 : vector<1x128xf32>
    %c0_77 = arith.constant 0 : index
    %c0_78 = arith.constant 0 : index
    %136 = vector.load %arg23[%c0_77, %c0_78] : memref<1x128xf32, #tpu.memory_space<vmem>>, vector<1x128xf32>
    %cst_79 = arith.constant 9.99999974E-6 : f32
    %137 = vector.broadcast %cst_79 : f32 to vector<1x128xf32>
    %138 = arith.addf %135, %137 : vector<1x128xf32>
    %139 = math.rsqrt %138 : vector<1x128xf32>
    %140 = arith.mulf %136, %139 : vector<1x128xf32>
    %c0_80 = arith.constant 0 : index
    %c0_81 = arith.constant 0 : index
    %141 = vector.load %arg24[%c0_80, %c0_81] : memref<1x128xf32, #tpu.memory_space<vmem>>, vector<1x128xf32>
    %142 = arith.mulf %128, %140 : vector<1x128xf32>
    %143 = arith.subf %141, %142 : vector<1x128xf32>
    %144 = vector.broadcast %140 : vector<1x128xf32> to vector<8x128xf32>
    %145 = arith.mulf %124, %144 : vector<8x128xf32>
    %146 = vector.broadcast %143 : vector<1x128xf32> to vector<8x128xf32>
    %147 = arith.addf %145, %146 : vector<8x128xf32>
    %cst_82 = arith.constant 0.000000e+00 : f32
    %148 = vector.broadcast %cst_82 : f32 to vector<8x128xf32>
    %149 = arith.maximumf %147, %148 : vector<8x128xf32>
    %c0_83 = arith.constant 0 : index
    %c0_84 = arith.constant 0 : index
    %150 = vector.load %arg25[%c0_83, %c0_84] : memref<128x128xf32, #tpu.memory_space<vmem>>, vector<128x128xf32>
    %cst_85 = arith.constant dense<0.000000e+00> : vector<8x128xf32>
    %151 = tpu.matmul %149, %150, %cst_85 {dimension_numbers = #tpu.dot_dimension_numbers<[1], [0], [0], [1], [0, 0, 1, 1], [], []>} : vector<8x128xf32>, vector<128x128xf32>, vector<8x128xf32> -> vector<8x128xf32>
    %c0_86 = arith.constant 0 : index
    %c0_87 = arith.constant 0 : index
    %152 = vector.load %arg26[%c0_86, %c0_87] : memref<1x128xf32, #tpu.memory_space<vmem>>, vector<1x128xf32>
    %153 = vector.broadcast %152 : vector<1x128xf32> to vector<8x128xf32>
    %154 = arith.addf %151, %153 : vector<8x128xf32>
    %155 = arith.addf %119, %154 : vector<8x128xf32>
    %cst_88 = arith.constant 0.000000e+00 : f32
    %156 = vector.broadcast %cst_88 : f32 to vector<8x128xf32>
    %157 = arith.maximumf %155, %156 : vector<8x128xf32>
    %c0_89 = arith.constant 0 : index
    %c0_90 = arith.constant 0 : index
    %158 = vector.load %arg27[%c0_89, %c0_90] : memref<128x128xf32, #tpu.memory_space<vmem>>, vector<128x128xf32>
    %cst_91 = arith.constant dense<0.000000e+00> : vector<8x128xf32>
    %159 = tpu.matmul %157, %158, %cst_91 {dimension_numbers = #tpu.dot_dimension_numbers<[1], [0], [0], [1], [0, 0, 1, 1], [], []>} : vector<8x128xf32>, vector<128x128xf32>, vector<8x128xf32> -> vector<8x128xf32>
    %c0_92 = arith.constant 0 : index
    %c0_93 = arith.constant 0 : index
    %160 = vector.load %arg28[%c0_92, %c0_93] : memref<1x128xf32, #tpu.memory_space<vmem>>, vector<1x128xf32>
    %161 = vector.broadcast %160 : vector<1x128xf32> to vector<8x128xf32>
    %162 = arith.addf %159, %161 : vector<8x128xf32>
    %cst_94 = arith.constant dense<0.000000e+00> : vector<128xf32>
    %163 = vector.multi_reduction <add>, %162, %cst_94 [0] : vector<8x128xf32> to vector<128xf32>
    %164 = vector.shape_cast %163 : vector<128xf32> to vector<1x128xf32>
    %cst_95 = arith.constant 8.000000e+00 : f32
    %165 = vector.broadcast %cst_95 : f32 to vector<1x128xf32>
    %166 = arith.divf %164, %165 : vector<1x128xf32>
    %167 = vector.broadcast %166 : vector<1x128xf32> to vector<8x128xf32>
    %168 = arith.subf %162, %167 : vector<8x128xf32>
    %169 = arith.mulf %168, %168 : vector<8x128xf32>
    %cst_96 = arith.constant dense<0.000000e+00> : vector<128xf32>
    %170 = vector.multi_reduction <add>, %169, %cst_96 [0] : vector<8x128xf32> to vector<128xf32>
    %171 = vector.shape_cast %170 : vector<128xf32> to vector<1x128xf32>
    %cst_97 = arith.constant 8.000000e+00 : f32
    %172 = vector.broadcast %cst_97 : f32 to vector<1x128xf32>
    %173 = arith.divf %171, %172 : vector<1x128xf32>
    %c0_98 = arith.constant 0 : index
    %c0_99 = arith.constant 0 : index
    %174 = vector.load %arg29[%c0_98, %c0_99] : memref<1x128xf32, #tpu.memory_space<vmem>>, vector<1x128xf32>
    %cst_100 = arith.constant 9.99999974E-6 : f32
    %175 = vector.broadcast %cst_100 : f32 to vector<1x128xf32>
    %176 = arith.addf %173, %175 : vector<1x128xf32>
    %177 = math.rsqrt %176 : vector<1x128xf32>
    %178 = arith.mulf %174, %177 : vector<1x128xf32>
    %c0_101 = arith.constant 0 : index
    %c0_102 = arith.constant 0 : index
    %179 = vector.load %arg30[%c0_101, %c0_102] : memref<1x128xf32, #tpu.memory_space<vmem>>, vector<1x128xf32>
    %180 = arith.mulf %166, %178 : vector<1x128xf32>
    %181 = arith.subf %179, %180 : vector<1x128xf32>
    %182 = vector.broadcast %178 : vector<1x128xf32> to vector<8x128xf32>
    %183 = arith.mulf %162, %182 : vector<8x128xf32>
    %184 = vector.broadcast %181 : vector<1x128xf32> to vector<8x128xf32>
    %185 = arith.addf %183, %184 : vector<8x128xf32>
    %cst_103 = arith.constant 0.000000e+00 : f32
    %186 = vector.broadcast %cst_103 : f32 to vector<8x128xf32>
    %187 = arith.maximumf %185, %186 : vector<8x128xf32>
    %c0_104 = arith.constant 0 : index
    %c0_105 = arith.constant 0 : index
    %188 = vector.load %arg31[%c0_104, %c0_105] : memref<128x128xf32, #tpu.memory_space<vmem>>, vector<128x128xf32>
    %cst_106 = arith.constant dense<0.000000e+00> : vector<8x128xf32>
    %189 = tpu.matmul %187, %188, %cst_106 {dimension_numbers = #tpu.dot_dimension_numbers<[1], [0], [0], [1], [0, 0, 1, 1], [], []>} : vector<8x128xf32>, vector<128x128xf32>, vector<8x128xf32> -> vector<8x128xf32>
    %c0_107 = arith.constant 0 : index
    %c0_108 = arith.constant 0 : index
    %190 = vector.load %arg32[%c0_107, %c0_108] : memref<1x128xf32, #tpu.memory_space<vmem>>, vector<1x128xf32>
    %191 = vector.broadcast %190 : vector<1x128xf32> to vector<8x128xf32>
    %192 = arith.addf %189, %191 : vector<8x128xf32>
    %193 = arith.addf %157, %192 : vector<8x128xf32>
    %cst_109 = arith.constant 0.000000e+00 : f32
    %194 = vector.broadcast %cst_109 : f32 to vector<8x128xf32>
    %195 = arith.maximumf %193, %194 : vector<8x128xf32>
    %c0_110 = arith.constant 0 : index
    %c0_111 = arith.constant 0 : index
    %196 = vector.load %arg33[%c0_110, %c0_111] : memref<8x128xf32, #tpu.memory_space<vmem>>, vector<8x128xf32>
    tpu.vector_store %arg33[%c0_110, %c0_111], %195 {strides = array<i32>} : memref<8x128xf32, #tpu.memory_space<vmem>>, vector<8x128xf32>,
    return
  }
}

</mosaic_0001>

<llo_original>
// kernel: unroll_net_forward.1
$region0: #{unroll_net_forward.1}
  #allocation0 [shape = 'u32[]', space=smem, size = 0x4, offset = 0x4, fixed_abs, tag = 'smem constant byte address 0x4 - core index']
  #allocation1 [shape = 'u32[144,128]{1,0:T(1,128)}', space=vmem, size = 0x12000, scoped, tag = 'internal scratch']
  %s0 = inlined_call_operand.smem [shape: u32[34], index: -1, kind: input, shape index: {}]
  %s1 = sld [smem:[%s0]]
  %s2 = scalar_lea.smem %s0, 1
  %s3 = sld [smem:[%s2]]
  %s4 = scalar_lea.smem %s0, 2
  %s5 = sld [smem:[%s4]]
  %s6 = scalar_lea.smem %s0, 3
  %s7 = sld [smem:[%s6]]
  %s8 = scalar_lea.smem %s0, 4
  %s9 = sld [smem:[%s8]]
  %s10 = scalar_lea.smem %s0, 5
  %s11 = sld [smem:[%s10]]
  %s12 = scalar_lea.smem %s0, 6
  %s13 = sld [smem:[%s12]]
  %s14 = scalar_lea.smem %s0, 7
  %s15 = sld [smem:[%s14]]
  %s16 = scalar_lea.smem %s0, 8
  %s17 = sld [smem:[%s16]]
  %s18 = scalar_lea.smem %s0, 9
  %s19 = sld [smem:[%s18]]
  %s20 = scalar_lea.smem %s0, 10
  %s21 = sld [smem:[%s20]]
  %s22 = scalar_lea.smem %s0, 11
  %s23 = sld [smem:[%s22]]
  %s24 = scalar_lea.smem %s0, 12
  %s25 = sld [smem:[%s24]]
  %s26 = scalar_lea.smem %s0, 13
  %s27 = sld [smem:[%s26]]
  %s28 = scalar_lea.smem %s0, 14
  %s29 = sld [smem:[%s28]]
  %s30 = scalar_lea.smem %s0, 15
  %s31 = sld [smem:[%s30]]
  %s32 = scalar_lea.smem %s0, 16
  %s33 = sld [smem:[%s32]]
  %s34 = scalar_lea.smem %s0, 17
  %s35 = sld [smem:[%s34]]
  %s36 = scalar_lea.smem %s0, 18
  %s37 = sld [smem:[%s36]]
  %s38 = scalar_lea.smem %s0, 19
  %s39 = sld [smem:[%s38]]
  %s40 = scalar_lea.smem %s0, 20
  %s41 = sld [smem:[%s40]]
  %s42 = scalar_lea.smem %s0, 21
  %s43 = sld [smem:[%s42]]
  %s44 = scalar_lea.smem %s0, 22
  %s45 = sld [smem:[%s44]]
  %s46 = scalar_lea.smem %s0, 23
  %s47 = sld [smem:[%s46]]
  %s48 = scalar_lea.smem %s0, 24
  %s49 = sld [smem:[%s48]]
  %s50 = scalar_lea.smem %s0, 25
  %s51 = sld [smem:[%s50]]
  %s52 = scalar_lea.smem %s0, 26
  %s53 = sld [smem:[%s52]]
  %s54 = scalar_lea.smem %s0, 27
  %s55 = sld [smem:[%s54]]
  %s56 = scalar_lea.smem %s0, 28
  %s57 = sld [smem:[%s56]]
  %s58 = scalar_lea.smem %s0, 29
  %s59 = sld [smem:[%s58]]
  %s60 = scalar_lea.smem %s0, 30
  %s61 = sld [smem:[%s60]]
  %s62 = scalar_lea.smem %s0, 31
  %s63 = sld [smem:[%s62]]
  %s64 = scalar_lea.smem %s0, 32
  %s65 = sld [smem:[%s64]]
  %s66 = scalar_lea.smem %s0, 33
  %s67 = sld [smem:[%s66]]
  %s68 = sld [smem:[#allocation0]]
  $region186: #{unroll_net_forward.1} parent=0
    _
  %s70 = ssub.s32 1, %s68
  %s71 = scalar_select 0, %s70, %s68
  $region1: #{unroll_net_forward.1} parent=0
    #allocation2 [shape = 'u8[262144]{0}', space=vmem, size = 0x40000, scoped, tag = 'input window, operand 1, single buffered']
    #allocation3 [shape = 's32[1]{0}', space=sflag, size = 0x4, scoped, tag = 'scoped memory for unroll_net_forward.1']
    #allocation4 [shape = 's32[1]{0}', space=sflag, size = 0x4, scoped, tag = 'scoped memory for unroll_net_forward.1']
    #allocation5 [shape = 'u8[262144]{0}', space=vmem, size = 0x40000, scoped, tag = 'input window, operand 5, single buffered']
    #allocation6 [shape = 's32[1]{0}', space=sflag, size = 0x4, scoped, tag = 'scoped memory for unroll_net_forward.1']
    #allocation7 [shape = 'u8[262144]{0}', space=vmem, size = 0x40000, scoped, tag = 'input window, operand 7, single buffered']
    #allocation8 [shape = 'u8[262144]{0}', space=vmem, size = 0x40000, scoped, tag = 'input window, operand 11, single buffered']
    #allocation9 [shape = 's32[1]{0}', space=sflag, size = 0x4, scoped, tag = 'scoped memory for unroll_net_forward.1']
    #allocation10 [shape = 'u8[262144]{0}', space=vmem, size = 0x40000, scoped, tag = 'input window, operand 13, single buffered']
    #allocation11 [shape = 'u8[131072]{0}', space=vmem, size = 0x20000, scoped, tag = 'input window, operand 17, single buffered']
    #allocation12 [shape = 's32[1]{0}', space=sflag, size = 0x4, scoped, tag = 'scoped memory for unroll_net_forward.1']
    #allocation13 [shape = 'u8[131072]{0}', space=vmem, size = 0x20000, scoped, tag = 'input window, operand 19, single buffered']
    #allocation14 [shape = 'u8[65536]{0}', space=vmem, size = 0x10000, scoped, tag = 'input window, operand 21, single buffered']
    #allocation15 [shape = 's32[1]{0}', space=sflag, size = 0x4, scoped, tag = 'scoped memory for unroll_net_forward.1']
    #allocation16 [shape = 'u8[65536]{0}', space=vmem, size = 0x10000, scoped, tag = 'input window, operand 25, single buffered']
    #allocation17 [shape = 'u8[65536]{0}', space=vmem, size = 0x10000, scoped, tag = 'input window, operand 27, single buffered']
    #allocation18 [shape = 's32[1]{0}', space=sflag, size = 0x4, scoped, tag = 'scoped memory for unroll_net_forward.1']
    #allocation19 [shape = 'u8[65536]{0}', space=vmem, size = 0x10000, scoped, tag = 'input window, operand 31, single buffered']
    #allocation20 [shape = 'u8[4096]{0}', space=vmem, size = 0x1000, scoped, tag = 'output window, operand 0, single buffered']
    %72 = vsyncpa [#allocation3], 0
    %73 = vsyncpa [#allocation6], 0
    %74 = vsyncpa [#allocation9], 0
    %75 = vsyncpa [#allocation12], 0
    %76 = vsyncpa [#allocation15], 0
    %77 = vsyncpa [#allocation18], 0
    %78 = vsyncpa [#allocation4], 0
    // Predicated region
    $region2: #{unroll_net_forward.1} parent=1 // pred_check
      _
    $region3: #{unroll_net_forward.1} parent=1 // pred_check_branch
      %80 = sbr.rel (0) target = $region5
    $region4: #{unroll_net_forward.1} parent=1 // pred_region
      _
    $region5: #{unroll_net_forward.1} parent=1 // pred_fallthru
      _
    // Predicated region
    $region6: #{unroll_net_forward.1} parent=1 // pred_check
      _
    $region7: #{unroll_net_forward.1} parent=1 // pred_check_branch
      %82 = sbr.rel (0) target = $region9
    $region8: #{unroll_net_forward.1} parent=1 // pred_region
      %s84 = ssub.s32 8192, 8192
      %85 = vsyncadd [#allocation3], %s84
      %s86 = sshll.u32 [#allocation2], 4
      %s87 = int_to_ptr.vmem [resolvable:$true] %s86
      %92 = dma.hbm_to_vmem [thread:$0]  %s3, 8192, %s87, [#allocation3], 256, 256, 16
    $region9: #{unroll_net_forward.1} parent=1 // pred_fallthru
      _
    // Predicated region
    $region10: #{unroll_net_forward.1} parent=1 // pred_check
      _
    $region11: #{unroll_net_forward.1} parent=1 // pred_check_branch
      %94 = sbr.rel (0) target = $region13
    $region12: #{unroll_net_forward.1} parent=1 // pred_region
      _
    $region13: #{unroll_net_forward.1} parent=1 // pred_fallthru
      _
    // Predicated region
    $region14: #{unroll_net_forward.1} parent=1 // pred_check
      _
    $region15: #{unroll_net_forward.1} parent=1 // pred_check_branch
      %96 = sbr.rel (0) target = $region17
    $region16: #{unroll_net_forward.1} parent=1 // pred_region
      _
    $region17: #{unroll_net_forward.1} parent=1 // pred_fallthru
      _
    // Predicated region
    $region18: #{unroll_net_forward.1} parent=1 // pred_check
      _
    $region19: #{unroll_net_forward.1} parent=1 // pred_check_branch
      %98 = sbr.rel (0) target = $region21
    $region20: #{unroll_net_forward.1} parent=1 // pred_region
      _
    $region21: #{unroll_net_forward.1} parent=1 // pred_fallthru
      _
    // Predicated region
    $region22: #{unroll_net_forward.1} parent=1 // pred_check
      _
    $region23: #{unroll_net_forward.1} parent=1 // pred_check_branch
      %100 = sbr.rel (0) target = $region25
    $region24: #{unroll_net_forward.1} parent=1 // pred_region
      %s102 = ssub.s32 8192, 8192
      %103 = vsyncadd [#allocation6], %s102
      %s104 = sshll.u32 [#allocation5], 4
      %s105 = int_to_ptr.vmem [resolvable:$true] %s104
      %110 = dma.hbm_to_vmem [thread:$0]  %s11, 8192, %s105, [#allocation6], 256, 256, 16
    $region25: #{unroll_net_forward.1} parent=1 // pred_fallthru
      _
    // Predicated region
    $region26: #{unroll_net_forward.1} parent=1 // pred_check
      _
    $region27: #{unroll_net_forward.1} parent=1 // pred_check_branch
      %112 = sbr.rel (0) target = $region29
    $region28: #{unroll_net_forward.1} parent=1 // pred_region
      _
    $region29: #{unroll_net_forward.1} parent=1 // pred_fallthru
      _
    // Predicated region
    $region30: #{unroll_net_forward.1} parent=1 // pred_check
      _
    $region31: #{unroll_net_forward.1} parent=1 // pred_check_branch
      %114 = sbr.rel (0) target = $region33
    $region32: #{unroll_net_forward.1} parent=1 // pred_region
      %s116 = ssub.s32 8192, 8192
      %117 = vsyncadd [#allocation6], %s116
      %s118 = sshll.u32 [#allocation7], 4
      %s119 = int_to_ptr.vmem [resolvable:$true] %s118
      %124 = dma.hbm_to_vmem [thread:$0]  %s15, 8192, %s119, [#allocation6], 256, 256, 16
    $region33: #{unroll_net_forward.1} parent=1 // pred_fallthru
      _
    // Predicated region
    $region34: #{unroll_net_forward.1} parent=1 // pred_check
      _
    $region35: #{unroll_net_forward.1} parent=1 // pred_check_branch
      %126 = sbr.rel (0) target = $region37
    $region36: #{unroll_net_forward.1} parent=1 // pred_region
      _
    $region37: #{unroll_net_forward.1} parent=1 // pred_fallthru
      _
    // Predicated region
    $region38: #{unroll_net_forward.1} parent=1 // pred_check
      _
    $region39: #{unroll_net_forward.1} parent=1 // pred_check_branch
      %128 = sbr.rel (0) target = $region41
    $region40: #{unroll_net_forward.1} parent=1 // pred_region
      _
    $region41: #{unroll_net_forward.1} parent=1 // pred_fallthru
      _
    // Predicated region
    $region42: #{unroll_net_forward.1} parent=1 // pred_check
      _
    $region43: #{unroll_net_forward.1} parent=1 // pred_check_branch
      %130 = sbr.rel (0) target = $region45
    $region44: #{unroll_net_forward.1} parent=1 // pred_region
      _
    $region45: #{unroll_net_forward.1} parent=1 // pred_fallthru
      _
    // Predicated region
    $region46: #{unroll_net_forward.1} parent=1 // pred_check
      _
    $region47: #{unroll_net_forward.1} parent=1 // pred_check_branch
      %132 = sbr.rel (0) target = $region49
    $region48: #{unroll_net_forward.1} parent=1 // pred_region
      %s134 = ssub.s32 8192, 8192
      %135 = vsyncadd [#allocation9], %s134
      %s136 = sshll.u32 [#allocation8], 4
      %s137 = int_to_ptr.vmem [resolvable:$true] %s136
      %142 = dma.hbm_to_vmem [thread:$0]  %s23, 8192, %s137, [#allocation9], 256, 256, 16
    $region49: #{unroll_net_forward.1} parent=1 // pred_fallthru
      _
    // Predicated region
    $region50: #{unroll_net_forward.1} parent=1 // pred_check
      _
    $region51: #{unroll_net_forward.1} parent=1 // pred_check_branch
      %144 = sbr.rel (0) target = $region53
    $region52: #{unroll_net_forward.1} parent=1 // pred_region
      _
    $region53: #{unroll_net_forward.1} parent=1 // pred_fallthru
      _
    // Predicated region
    $region54: #{unroll_net_forward.1} parent=1 // pred_check
      _
    $region55: #{unroll_net_forward.1} parent=1 // pred_check_branch
      %146 = sbr.rel (0) target = $region57
    $region56: #{unroll_net_forward.1} parent=1 // pred_region
      %s148 = ssub.s32 8192, 8192
      %149 = vsyncadd [#allocation9], %s148
      %s150 = sshll.u32 [#allocation10], 4
      %s151 = int_to_ptr.vmem [resolvable:$true] %s150
      %156 = dma.hbm_to_vmem [thread:$0]  %s27, 8192, %s151, [#allocation9], 256, 256, 16
    $region57: #{unroll_net_forward.1} parent=1 // pred_fallthru
      _
    // Predicated region
    $region58: #{unroll_net_forward.1} parent=1 // pred_check
      _
    $region59: #{unroll_net_forward.1} parent=1 // pred_check_branch
      %158 = sbr.rel (0) target = $region61
    $region60: #{unroll_net_forward.1} parent=1 // pred_region
      _
    $region61: #{unroll_net_forward.1} parent=1 // pred_fallthru
      _
    // Predicated region
    $region62: #{unroll_net_forward.1} parent=1 // pred_check
      _
    $region63: #{unroll_net_forward.1} parent=1 // pred_check_branch
      %160 = sbr.rel (0) target = $region65
    $region64: #{unroll_net_forward.1} parent=1 // pred_region
      _
    $region65: #{unroll_net_forward.1} parent=1 // pred_fallthru
      _
    // Predicated region
    $region66: #{unroll_net_forward.1} parent=1 // pred_check
      _
    $region67: #{unroll_net_forward.1} parent=1 // pred_check_branch
      %162 = sbr.rel (0) target = $region69
    $region68: #{unroll_net_forward.1} parent=1 // pred_region
      _
    $region69: #{unroll_net_forward.1} parent=1 // pred_fallthru
      _
    // Predicated region
    $region70: #{unroll_net_forward.1} parent=1 // pred_check
      _
    $region71: #{unroll_net_forward.1} parent=1 // pred_check_branch
      %164 = sbr.rel (0) target = $region73
    $region72: #{unroll_net_forward.1} parent=1 // pred_region
      %s166 = ssub.s32 4096, 4096
      %167 = vsyncadd [#allocation12], %s166
      %s168 = sshll.u32 [#allocation11], 4
      %s169 = int_to_ptr.vmem [resolvable:$true] %s168
      %174 = dma.hbm_to_vmem [thread:$0]  %s35, 4096, %s169, [#allocation12], 128, 128, 8
    $region73: #{unroll_net_forward.1} parent=1 // pred_fallthru
      _
    // Predicated region
    $region74: #{unroll_net_forward.1} parent=1 // pred_check
      _
    $region75: #{unroll_net_forward.1} parent=1 // pred_check_branch
      %176 = sbr.rel (0) target = $region77
    $region76: #{unroll_net_forward.1} parent=1 // pred_region
      _
    $region77: #{unroll_net_forward.1} parent=1 // pred_fallthru
      _
    // Predicated region
    $region78: #{unroll_net_forward.1} parent=1 // pred_check
      _
    $region79: #{unroll_net_forward.1} parent=1 // pred_check_branch
      %178 = sbr.rel (0) target = $region81
    $region80: #{unroll_net_forward.1} parent=1 // pred_region
      %s180 = ssub.s32 4096, 4096
      %181 = vsyncadd [#allocation12], %s180
      %s182 = sshll.u32 [#allocation13], 4
      %s183 = int_to_ptr.vmem [resolvable:$true] %s182
      %188 = dma.hbm_to_vmem [thread:$0]  %s39, 4096, %s183, [#allocation12], 128, 128, 8
    $region81: #{unroll_net_forward.1} parent=1 // pred_fallthru
      _
    // Predicated region
    $region82: #{unroll_net_forward.1} parent=1 // pred_check
      _
    $region83: #{unroll_net_forward.1} parent=1 // pred_check_branch
      %190 = sbr.rel (0) target = $region85
    $region84: #{unroll_net_forward.1} parent=1 // pred_region
      _
    $region85: #{unroll_net_forward.1} parent=1 // pred_fallthru
      _
    // Predicated region
    $region86: #{unroll_net_forward.1} parent=1 // pred_check
      _
    $region87: #{unroll_net_forward.1} parent=1 // pred_check_branch
      %192 = sbr.rel (0) target = $region89
    $region88: #{unroll_net_forward.1} parent=1 // pred_region
      %s194 = ssub.s32 2048, 2048
      %195 = vsyncadd [#allocation15], %s194
      %s196 = sshll.u32 [#allocation14], 4
      %s197 = int_to_ptr.vmem [resolvable:$true] %s196
      %202 = dma.hbm_to_vmem [thread:$0]  %s43, 2048, %s197, [#allocation15], 128, 128, 8
    $region89: #{unroll_net_forward.1} parent=1 // pred_fallthru
      _
    // Predicated region
    $region90: #{unroll_net_forward.1} parent=1 // pred_check
      _
    $region91: #{unroll_net_forward.1} parent=1 // pred_check_branch
      %204 = sbr.rel (0) target = $region93
    $region92: #{unroll_net_forward.1} parent=1 // pred_region
      _
    $region93: #{unroll_net_forward.1} parent=1 // pred_fallthru
      _
    // Predicated region
    $region94: #{unroll_net_forward.1} parent=1 // pred_check
      _
    $region95: #{unroll_net_forward.1} parent=1 // pred_check_branch
      %206 = sbr.rel (0) target = $region97
    $region96: #{unroll_net_forward.1} parent=1 // pred_region
      _
    $region97: #{unroll_net_forward.1} parent=1 // pred_fallthru
      _
    // Predicated region
    $region98: #{unroll_net_forward.1} parent=1 // pred_check
      _
    $region99: #{unroll_net_forward.1} parent=1 // pred_check_branch
      %208 = sbr.rel (0) target = $region101
    $region100: #{unroll_net_forward.1} parent=1 // pred_region
      _
    $region101: #{unroll_net_forward.1} parent=1 // pred_fallthru
      _
    // Predicated region
    $region102: #{unroll_net_forward.1} parent=1 // pred_check
      _
    $region103: #{unroll_net_forward.1} parent=1 // pred_check_branch
      %210 = sbr.rel (0) target = $region105
    $region104: #{unroll_net_forward.1} parent=1 // pred_region
      %s212 = ssub.s32 2048, 2048
      %213 = vsyncadd [#allocation15], %s212
      %s214 = sshll.u32 [#allocation16], 4
      %s215 = int_to_ptr.vmem [resolvable:$true] %s214
      %220 = dma.hbm_to_vmem [thread:$0]  %s51, 2048, %s215, [#allocation15], 128, 128, 8
    $region105: #{unroll_net_forward.1} parent=1 // pred_fallthru
      _
    // Predicated region
    $region106: #{unroll_net_forward.1} parent=1 // pred_check
      _
    $region107: #{unroll_net_forward.1} parent=1 // pred_check_branch
      %222 = sbr.rel (0) target = $region109
    $region108: #{unroll_net_forward.1} parent=1 // pred_region
      _
    $region109: #{unroll_net_forward.1} parent=1 // pred_fallthru
      _
    // Predicated region
    $region110: #{unroll_net_forward.1} parent=1 // pred_check
      _
    $region111: #{unroll_net_forward.1} parent=1 // pred_check_branch
      %224 = sbr.rel (0) target = $region113
    $region112: #{unroll_net_forward.1} parent=1 // pred_region
      %s226 = ssub.s32 2048, 2048
      %227 = vsyncadd [#allocation18], %s226
      %s228 = sshll.u32 [#allocation17], 4
      %s229 = int_to_ptr.vmem [resolvable:$true] %s228
      %234 = dma.hbm_to_vmem [thread:$0]  %s55, 2048, %s229, [#allocation18], 128, 128, 8
    $region113: #{unroll_net_forward.1} parent=1 // pred_fallthru
      _
    // Predicated region
    $region114: #{unroll_net_forward.1} parent=1 // pred_check
      _
    $region115: #{unroll_net_forward.1} parent=1 // pred_check_branch
      %236 = sbr.rel (0) target = $region117
    $region116: #{unroll_net_forward.1} parent=1 // pred_region
      _
    $region117: #{unroll_net_forward.1} parent=1 // pred_fallthru
      _
    // Predicated region
    $region118: #{unroll_net_forward.1} parent=1 // pred_check
      _
    $region119: #{unroll_net_forward.1} parent=1 // pred_check_branch
      %238 = sbr.rel (0) target = $region121
    $region120: #{unroll_net_forward.1} parent=1 // pred_region
      _
    $region121: #{unroll_net_forward.1} parent=1 // pred_fallthru
      _
    // Predicated region
    $region122: #{unroll_net_forward.1} parent=1 // pred_check
      _
    $region123: #{unroll_net_forward.1} parent=1 // pred_check_branch
      %240 = sbr.rel (0) target = $region125
    $region124: #{unroll_net_forward.1} parent=1 // pred_region
      _
    $region125: #{unroll_net_forward.1} parent=1 // pred_fallthru
      _
    // Predicated region
    $region126: #{unroll_net_forward.1} parent=1 // pred_check
      _
    $region127: #{unroll_net_forward.1} parent=1 // pred_check_branch
      %242 = sbr.rel (0) target = $region129
    $region128: #{unroll_net_forward.1} parent=1 // pred_region
      %s244 = ssub.s32 2048, 2048
      %245 = vsyncadd [#allocation18], %s244
      %s246 = sshll.u32 [#allocation19], 4
      %s247 = int_to_ptr.vmem [resolvable:$true] %s246
      %252 = dma.hbm_to_vmem [thread:$0]  %s63, 2048, %s247, [#allocation18], 128, 128, 8
    $region129: #{unroll_net_forward.1} parent=1 // pred_fallthru
      _
    // Predicated region
    $region130: #{unroll_net_forward.1} parent=1 // pred_check
      _
    $region131: #{unroll_net_forward.1} parent=1 // pred_check_branch
      %254 = sbr.rel (0) target = $region133
    $region132: #{unroll_net_forward.1} parent=1 // pred_region
      _
    $region133: #{unroll_net_forward.1} parent=1 // pred_fallthru
      _
    // Predicated region
    $region134: #{unroll_net_forward.1} parent=1 // pred_check
      _
    $region135: #{unroll_net_forward.1} parent=1 // pred_check_branch
      %256 = sbr.rel (0) target = $region137
    $region136: #{unroll_net_forward.1} parent=1 // pred_region
      %257 = dma.done [#allocation3], 8192
    $region137: #{unroll_net_forward.1} parent=1 // pred_fallthru
      _
    // Predicated region
    $region138: #{unroll_net_forward.1} parent=1 // pred_check
      _
    $region139: #{unroll_net_forward.1} parent=1 // pred_check_branch
      %259 = sbr.rel (0) target = $region141
    $region140: #{unroll_net_forward.1} parent=1 // pred_region
      %260 = dma.done [#allocation6], 8192
    $region141: #{unroll_net_forward.1} parent=1 // pred_fallthru
      _
    // Predicated region
    $region142: #{unroll_net_forward.1} parent=1 // pred_check
      _
    $region143: #{unroll_net_forward.1} parent=1 // pred_check_branch
      %262 = sbr.rel (0) target = $region145
    $region144: #{unroll_net_forward.1} parent=1 // pred_region
      %263 = dma.done [#allocation6], 8192
    $region145: #{unroll_net_forward.1} parent=1 // pred_fallthru
      _
    // Predicated region
    $region146: #{unroll_net_forward.1} parent=1 // pred_check
      _
    $region147: #{unroll_net_forward.1} parent=1 // pred_check_branch
      %265 = sbr.rel (0) target = $region149
    $region148: #{unroll_net_forward.1} parent=1 // pred_region
      %266 = dma.done [#allocation9], 8192
    $region149: #{unroll_net_forward.1} parent=1 // pred_fallthru
      _
    // Predicated region
    $region150: #{unroll_net_forward.1} parent=1 // pred_check
      _
    $region151: #{unroll_net_forward.1} parent=1 // pred_check_branch
      %268 = sbr.rel (0) target = $region153
    $region152: #{unroll_net_forward.1} parent=1 // pred_region
      %269 = dma.done [#allocation9], 8192
    $region153: #{unroll_net_forward.1} parent=1 // pred_fallthru
      _
    // Predicated region
    $region154: #{unroll_net_forward.1} parent=1 // pred_check
      _
    $region155: #{unroll_net_forward.1} parent=1 // pred_check_branch
      %271 = sbr.rel (0) target = $region157
    $region156: #{unroll_net_forward.1} parent=1 // pred_region
      %272 = dma.done [#allocation12], 4096
    $region157: #{unroll_net_forward.1} parent=1 // pred_fallthru
      _
    // Predicated region
    $region158: #{unroll_net_forward.1} parent=1 // pred_check
      _
    $region159: #{unroll_net_forward.1} parent=1 // pred_check_branch
      %274 = sbr.rel (0) target = $region161
    $region160: #{unroll_net_forward.1} parent=1 // pred_region
      %275 = dma.done [#allocation12], 4096
    $region161: #{unroll_net_forward.1} parent=1 // pred_fallthru
      _
    // Predicated region
    $region162: #{unroll_net_forward.1} parent=1 // pred_check
      _
    $region163: #{unroll_net_forward.1} parent=1 // pred_check_branch
      %277 = sbr.rel (0) target = $region165
    $region164: #{unroll_net_forward.1} parent=1 // pred_region
      %278 = dma.done [#allocation15], 2048
    $region165: #{unroll_net_forward.1} parent=1 // pred_fallthru
      _
    // Predicated region
    $region166: #{unroll_net_forward.1} parent=1 // pred_check
      _
    $region167: #{unroll_net_forward.1} parent=1 // pred_check_branch
      %280 = sbr.rel (0) target = $region169
    $region168: #{unroll_net_forward.1} parent=1 // pred_region
      %281 = dma.done [#allocation15], 2048
    $region169: #{unroll_net_forward.1} parent=1 // pred_fallthru
      _
    // Predicated region
    $region170: #{unroll_net_forward.1} parent=1 // pred_check
      _
    $region171: #{unroll_net_forward.1} parent=1 // pred_check_branch
      %283 = sbr.rel (0) target = $region173
    $region172: #{unroll_net_forward.1} parent=1 // pred_region
      %284 = dma.done [#allocation18], 2048
    $region173: #{unroll_net_forward.1} parent=1 // pred_fallthru
      _
    // Predicated region
    $region174: #{unroll_net_forward.1} parent=1 // pred_check
      _
    $region175: #{unroll_net_forward.1} parent=1 // pred_check_branch
      %286 = sbr.rel (0) target = $region177
    $region176: #{unroll_net_forward.1} parent=1 // pred_region
      %287 = dma.done [#allocation18], 2048
    $region177: #{unroll_net_forward.1} parent=1 // pred_fallthru
      _
    %v288 = vld [vmem:[%s1] sm:$0xff]
    %v289 = vld [vmem:[%s1 + $0x8] sm:$0xff]
    %v290 = vld [vmem:[#allocation2] sm:$0xff]
    %v291 = vld [vmem:[#allocation2 + $0x8] sm:$0xff]
    %v292 = vld [vmem:[#allocation2 + $0x10] sm:$0xff]
    %v293 = vld [vmem:[#allocation2 + $0x18] sm:$0xff]
    %v294 = vld [vmem:[#allocation2 + $0x20] sm:$0xff]
    %v295 = vld [vmem:[#allocation2 + $0x28] sm:$0xff]
    %v296 = vld [vmem:[#allocation2 + $0x30] sm:$0xff]
    %v297 = vld [vmem:[#allocation2 + $0x38] sm:$0xff]
    %v298 = vld [vmem:[#allocation2 + $0x40] sm:$0xff]
    %v299 = vld [vmem:[#allocation2 + $0x48] sm:$0xff]
    %v300 = vld [vmem:[#allocation2 + $0x50] sm:$0xff]
    %v301 = vld [vmem:[#allocation2 + $0x58] sm:$0xff]
    %v302 = vld [vmem:[#allocation2 + $0x60] sm:$0xff]
    %v303 = vld [vmem:[#allocation2 + $0x68] sm:$0xff]
    %v304 = vld [vmem:[#allocation2 + $0x70] sm:$0xff]
    %v305 = vld [vmem:[#allocation2 + $0x78] sm:$0xff]
    %v306 = vld [vmem:[#allocation2 + $0x80] sm:$0xff]
    %v307 = vld [vmem:[#allocation2 + $0x88] sm:$0xff]
    %v308 = vld [vmem:[#allocation2 + $0x90] sm:$0xff]
    %v309 = vld [vmem:[#allocation2 + $0x98] sm:$0xff]
    %v310 = vld [vmem:[#allocation2 + $0xa0] sm:$0xff]
    %v311 = vld [vmem:[#allocation2 + $0xa8] sm:$0xff]
    %v312 = vld [vmem:[#allocation2 + $0xb0] sm:$0xff]
    %v313 = vld [vmem:[#allocation2 + $0xb8] sm:$0xff]
    %v314 = vld [vmem:[#allocation2 + $0xc0] sm:$0xff]
    %v315 = vld [vmem:[#allocation2 + $0xc8] sm:$0xff]
    %v316 = vld [vmem:[#allocation2 + $0xd0] sm:$0xff]
    %v317 = vld [vmem:[#allocation2 + $0xd8] sm:$0xff]
    %v318 = vld [vmem:[#allocation2 + $0xe0] sm:$0xff]
    %v319 = vld [vmem:[#allocation2 + $0xe8] sm:$0xff]
    %v320 = vld [vmem:[#allocation2 + $0xf0] sm:$0xff]
    %v321 = vld [vmem:[#allocation2 + $0xf8] sm:$0xff]
    %v322 = vld [vmem:[#allocation2 + $0x100] sm:$0xff]
    %v323 = vld [vmem:[#allocation2 + $0x108] sm:$0xff]
    %v324 = vld [vmem:[#allocation2 + $0x110] sm:$0xff]
    %v325 = vld [vmem:[#allocation2 + $0x118] sm:$0xff]
    %v326 = vld [vmem:[#allocation2 + $0x120] sm:$0xff]
    %v327 = vld [vmem:[#allocation2 + $0x128] sm:$0xff]
    %v328 = vld [vmem:[#allocation2 + $0x130] sm:$0xff]
    %v329 = vld [vmem:[#allocation2 + $0x138] sm:$0xff]
    %v330 = vld [vmem:[#allocation2 + $0x140] sm:$0xff]
    %v331 = vld [vmem:[#allocation2 + $0x148] sm:$0xff]
    %v332 = vld [vmem:[#allocation2 + $0x150] sm:$0xff]
    %v333 = vld [vmem:[#allocation2 + $0x158] sm:$0xff]
    %v334 = vld [vmem:[#allocation2 + $0x160] sm:$0xff]
    %v335 = vld [vmem:[#allocation2 + $0x168] sm:$0xff]
    %v336 = vld [vmem:[#allocation2 + $0x170] sm:$0xff]
    %v337 = vld [vmem:[#allocation2 + $0x178] sm:$0xff]
    %v338 = vld [vmem:[#allocation2 + $0x180] sm:$0xff]
    %v339 = vld [vmem:[#allocation2 + $0x188] sm:$0xff]
    %v340 = vld [vmem:[#allocation2 + $0x190] sm:$0xff]
    %v341 = vld [vmem:[#allocation2 + $0x198] sm:$0xff]
    %v342 = vld [vmem:[#allocation2 + $0x1a0] sm:$0xff]
    %v343 = vld [vmem:[#allocation2 + $0x1a8] sm:$0xff]
    %v344 = vld [vmem:[#allocation2 + $0x1b0] sm:$0xff]
    %v345 = vld [vmem:[#allocation2 + $0x1b8] sm:$0xff]
    %v346 = vld [vmem:[#allocation2 + $0x1c0] sm:$0xff]
    %v347 = vld [vmem:[#allocation2 + $0x1c8] sm:$0xff]
    %v348 = vld [vmem:[#allocation2 + $0x1d0] sm:$0xff]
    %v349 = vld [vmem:[#allocation2 + $0x1d8] sm:$0xff]
    %v350 = vld [vmem:[#allocation2 + $0x1e0] sm:$0xff]
    %v351 = vld [vmem:[#allocation2 + $0x1e8] sm:$0xff]
    %v352 = vld [vmem:[#allocation2 + $0x1f0] sm:$0xff]
    %v353 = vld [vmem:[#allocation2 + $0x1f8] sm:$0xff]
    %v354 = vld [vmem:[%s5] sm:$0x3]
    %v356 = vlaneseq
    %v357 = vshrl.u32 %v356, 7
    %v358 = vsub.s32 0, %v357
    %v359 = vrot.slane %v354, %v358
    %v360 = vlaneseq
    %v361 = vshrl.u32 %v360, 7
    %v362 = vsub.s32 1, %v361
    %v363 = vrot.slane %v354, %v362
    %366 = vmatprep.subr.mxu0 %v321
    %367 = vmatpush1.msra.mxu0 %v320
    %368 = vmatprep.subr.mxu0 %v319
    %369 = vmatpush1.msra.mxu0 %v318
    %370 = vmatprep.subr.mxu0 %v317
    %371 = vmatpush1.msra.mxu0 %v316
    %372 = vmatprep.subr.mxu0 %v315
    %373 = vmatpush1.msra.mxu0 %v314
    %374 = vmatprep.subr.mxu0 %v313
    %375 = vmatpush1.msra.mxu0 %v312
    %376 = vmatprep.subr.mxu0 %v311
    %377 = vmatpush1.msra.mxu0 %v310
    %378 = vmatprep.subr.mxu0 %v309
    %379 = vmatpush1.msra.mxu0 %v308
    %380 = vmatprep.subr.mxu0 %v307
    %381 = vmatpush1.msra.mxu0 %v306
    %382 = vmatprep.subr.mxu0 %v305
    %383 = vmatpush1.msra.mxu0 %v304
    %384 = vmatprep.subr.mxu0 %v303
    %385 = vmatpush1.msra.mxu0 %v302
    %386 = vmatprep.subr.mxu0 %v301
    %387 = vmatpush1.msra.mxu0 %v300
    %388 = vmatprep.subr.mxu0 %v299
    %389 = vmatpush1.msra.mxu0 %v298
    %390 = vmatprep.subr.mxu0 %v297
    %391 = vmatpush1.msra.mxu0 %v296
    %392 = vmatprep.subr.mxu0 %v295
    %393 = vmatpush1.msra.mxu0 %v294
    %394 = vmatprep.subr.mxu0 %v293
    %395 = vmatpush1.msra.mxu0 %v292
    %396 = vmatprep.subr.mxu0 %v291
    %397 = vmatpush1.msra.mxu0 %v290
    %398 = vmatprep.subr.mxu0 %v353
    %399 = vmatpush2.msra.mxu0 %v352
    %400 = vmatprep.subr.mxu0 %v351
    %401 = vmatpush2.msra.mxu0 %v350
    %402 = vmatprep.subr.mxu0 %v349
    %403 = vmatpush2.msra.mxu0 %v348
    %404 = vmatprep.subr.mxu0 %v347
    %405 = vmatpush2.msra.mxu0 %v346
    %406 = vmatprep.subr.mxu0 %v345
    %407 = vmatpush2.msra.mxu0 %v344
    %408 = vmatprep.subr.mxu0 %v343
    %409 = vmatpush2.msra.mxu0 %v342
    %410 = vmatprep.subr.mxu0 %v341
    %411 = vmatpush2.msra.mxu0 %v340
    %412 = vmatprep.subr.mxu0 %v339
    %413 = vmatpush2.msra.mxu0 %v338
    %414 = vmatprep.subr.mxu0 %v337
    %415 = vmatpush2.msra.mxu0 %v336
    %416 = vmatprep.subr.mxu0 %v335
    %417 = vmatpush2.msra.mxu0 %v334
    %418 = vmatprep.subr.mxu0 %v333
    %419 = vmatpush2.msra.mxu0 %v332
    %420 = vmatprep.subr.mxu0 %v331
    %421 = vmatpush2.msra.mxu0 %v330
    %422 = vmatprep.subr.mxu0 %v329
    %423 = vmatpush2.msra.mxu0 %v328
    %424 = vmatprep.subr.mxu0 %v327
    %425 = vmatpush2.msra.mxu0 %v326
    %426 = vmatprep.subr.mxu0 %v325
    %427 = vmatpush2.msra.mxu0 %v324
    %428 = vmatprep.subr.mxu0 %v323
    %429 = vmatpush2.msra.mxu0 %v322
    %430 = vmatprep.mubr.f32.mxu0 %v289
    %431 = vmatmul.mubr.f32.gmra.mxu0 %v288
    %v432 = vpop.f32.mrf.mxu0
    %v433 = vadd.f32 %v359, %v432
    %v434 = vpop.f32.mrf.mxu0
    %v435 = vadd.f32 %v363, %v434
    %436 = vdwg.mxu0
    %v437 = vrot.slane %v433, 4
    %v438 = vadd.f32 %v433, %v437
    %v439 = vrot.slane %v438, 2
    %v440 = vadd.f32 %v438, %v439
    %v441 = vrot.slane %v440, 1
    %v442 = vadd.f32 %v440, %v441
    %v443 = vrot.slane %v435, 4
    %v444 = vadd.f32 %v435, %v443
    %v445 = vrot.slane %v444, 2
    %v446 = vadd.f32 %v444, %v445
    %v447 = vrot.slane %v446, 1
    %v448 = vadd.f32 %v446, %v447
    %v449 = vrcp.pop 8.0
    %v450 = vmul.f32 %v442, %v449
    %v451 = vmul.f32 %v448, %v449
    %v452 = vsub.f32 %v433, %v450
    %v453 = vsub.f32 %v435, %v451
    %v454 = vmul.f32 %v452, %v452
    %v455 = vmul.f32 %v453, %v453
    %v456 = vrot.slane %v454, 4
    %v457 = vadd.f32 %v454, %v456
    %v458 = vrot.slane %v457, 2
    %v459 = vadd.f32 %v457, %v458
    %v460 = vrot.slane %v459, 1
    %v461 = vadd.f32 %v459, %v460
    %v462 = vrot.slane %v455, 4
    %v463 = vadd.f32 %v455, %v462
    %v464 = vrot.slane %v463, 2
    %v465 = vadd.f32 %v463, %v464
    %v466 = vrot.slane %v465, 1
    %v467 = vadd.f32 %v465, %v466
    %v468 = vmul.f32 %v461, %v449
    %v469 = vmul.f32 %v467, %v449
    %v470 = vld [vmem:[%s7] sm:$0x3]
    %v471 = vadd.f32 %v468, 1e-05
    %v472 = vadd.f32 %v469, 1e-05
    %v473 = vrsqrt.pop %v471
    %v474 = vrsqrt.pop %v472
    %v477 = vcombine.low %v473, %v474
    %v479 = vunpack.c.l.s4 1966171168
    %v480 = vunpack.c.0.s8 %v479
    %v481 = vlaneseq
    %v482 = vshrl.u32 %v481, 7
    %v483 = vsub.s32 %v480, %v482
    %v484 = vrot.slane %v477, %v483
    %v486 = vunpack.c.l.s4 1966171168
    %v487 = vunpack.c.0.s8 %v486
    %v488 = vlaneseq
    %v489 = vshrl.u32 %v488, 7
    %v490 = vsub.s32 %v487, %v489
    %v491 = vrot.slane %v484, %v490
    %v493 = vmul.f32 %v470, %v491
    %v494 = vld [vmem:[%s9] sm:$0x3]
    %v496 = vlaneseq
    %v497 = vshrl.u32 %v496, 7
    %v498 = vsub.s32 0, %v497
    %v499 = vrot.slane %v493, %v498
    %v500 = vlaneseq
    %v501 = vshrl.u32 %v500, 7
    %v502 = vsub.s32 1, %v501
    %v503 = vrot.slane %v493, %v502
    %v506 = vmul.f32 %v450, %v499
    %v507 = vmul.f32 %v451, %v503
    %v510 = vcombine.low %v506, %v507
    %v512 = vunpack.c.l.s4 1966171168
    %v513 = vunpack.c.0.s8 %v512
    %v514 = vlaneseq
    %v515 = vshrl.u32 %v514, 7
    %v516 = vsub.s32 %v513, %v515
    %v517 = vrot.slane %v510, %v516
    %v519 = vunpack.c.l.s4 1966171168
    %v520 = vunpack.c.0.s8 %v519
    %v521 = vlaneseq
    %v522 = vshrl.u32 %v521, 7
    %v523 = vsub.s32 %v520, %v522
    %v524 = vrot.slane %v517, %v523
    %v526 = vsub.f32 %v494, %v524
    %v527 = vmul.f32 %v433, %v499
    %v528 = vmul.f32 %v435, %v503
    %v530 = vlaneseq
    %v531 = vshrl.u32 %v530, 7
    %v532 = vsub.s32 0, %v531
    %v533 = vrot.slane %v526, %v532
    %v534 = vlaneseq
    %v535 = vshrl.u32 %v534, 7
    %v536 = vsub.s32 1, %v535
    %v537 = vrot.slane %v526, %v536
    %v540 = vadd.f32 %v527, %v533
    %v541 = vadd.f32 %v528, %v537
    %v542 = vmax.f32 %v540, 0.0
    %v543 = vmax.f32 %v541, 0.0
    %v544 = vld [vmem:[#allocation5] sm:$0xff]
    %v545 = vld [vmem:[#allocation5 + $0x8] sm:$0xff]
    %v546 = vld [vmem:[#allocation5 + $0x10] sm:$0xff]
    %v547 = vld [vmem:[#allocation5 + $0x18] sm:$0xff]
    %v548 = vld [vmem:[#allocation5 + $0x20] sm:$0xff]
    %v549 = vld [vmem:[#allocation5 + $0x28] sm:$0xff]
    %v550 = vld [vmem:[#allocation5 + $0x30] sm:$0xff]
    %v551 = vld [vmem:[#allocation5 + $0x38] sm:$0xff]
    %v552 = vld [vmem:[#allocation5 + $0x40] sm:$0xff]
    %v553 = vld [vmem:[#allocation5 + $0x48] sm:$0xff]
    %v554 = vld [vmem:[#allocation5 + $0x50] sm:$0xff]
    %v555 = vld [vmem:[#allocation5 + $0x58] sm:$0xff]
    %v556 = vld [vmem:[#allocation5 + $0x60] sm:$0xff]
    %v557 = vld [vmem:[#allocation5 + $0x68] sm:$0xff]
    %v558 = vld [vmem:[#allocation5 + $0x70] sm:$0xff]
    %v559 = vld [vmem:[#allocation5 + $0x78] sm:$0xff]
    %v560 = vld [vmem:[#allocation5 + $0x80] sm:$0xff]
    %v561 = vld [vmem:[#allocation5 + $0x88] sm:$0xff]
    %v562 = vld [vmem:[#allocation5 + $0x90] sm:$0xff]
    %v563 = vld [vmem:[#allocation5 + $0x98] sm:$0xff]
    %v564 = vld [vmem:[#allocation5 + $0xa0] sm:$0xff]
    %v565 = vld [vmem:[#allocation5 + $0xa8] sm:$0xff]
    %v566 = vld [vmem:[#allocation5 + $0xb0] sm:$0xff]
    %v567 = vld [vmem:[#allocation5 + $0xb8] sm:$0xff]
    %v568 = vld [vmem:[#allocation5 + $0xc0] sm:$0xff]
    %v569 = vld [vmem:[#allocation5 + $0xc8] sm:$0xff]
    %v570 = vld [vmem:[#allocation5 + $0xd0] sm:$0xff]
    %v571 = vld [vmem:[#allocation5 + $0xd8] sm:$0xff]
    %v572 = vld [vmem:[#allocation5 + $0xe0] sm:$0xff]
    %v573 = vld [vmem:[#allocation5 + $0xe8] sm:$0xff]
    %v574 = vld [vmem:[#allocation5 + $0xf0] sm:$0xff]
    %v575 = vld [vmem:[#allocation5 + $0xf8] sm:$0xff]
    %v576 = vld [vmem:[#allocation5 + $0x100] sm:$0xff]
    %v577 = vld [vmem:[#allocation5 + $0x108] sm:$0xff]
    %v578 = vld [vmem:[#allocation5 + $0x110] sm:$0xff]
    %v579 = vld [vmem:[#allocation5 + $0x118] sm:$0xff]
    %v580 = vld [vmem:[#allocation5 + $0x120] sm:$0xff]
    %v581 = vld [vmem:[#allocation5 + $0x128] sm:$0xff]
    %v582 = vld [vmem:[#allocation5 + $0x130] sm:$0xff]
    %v583 = vld [vmem:[#allocation5 + $0x138] sm:$0xff]
    %v584 = vld [vmem:[#allocation5 + $0x140] sm:$0xff]
    %v585 = vld [vmem:[#allocation5 + $0x148] sm:$0xff]
    %v586 = vld [vmem:[#allocation5 + $0x150] sm:$0xff]
    %v587 = vld [vmem:[#allocation5 + $0x158] sm:$0xff]
    %v588 = vld [vmem:[#allocation5 + $0x160] sm:$0xff]
    %v589 = vld [vmem:[#allocation5 + $0x168] sm:$0xff]
    %v590 = vld [vmem:[#allocation5 + $0x170] sm:$0xff]
    %v591 = vld [vmem:[#allocation5 + $0x178] sm:$0xff]
    %v592 = vld [vmem:[#allocation5 + $0x180] sm:$0xff]
    %v593 = vld [vmem:[#allocation5 + $0x188] sm:$0xff]
    %v594 = vld [vmem:[#allocation5 + $0x190] sm:$0xff]
    %v595 = vld [vmem:[#allocation5 + $0x198] sm:$0xff]
    %v596 = vld [vmem:[#allocation5 + $0x1a0] sm:$0xff]
    %v597 = vld [vmem:[#allocation5 + $0x1a8] sm:$0xff]
    %v598 = vld [vmem:[#allocation5 + $0x1b0] sm:$0xff]
    %v599 = vld [vmem:[#allocation5 + $0x1b8] sm:$0xff]
    %v600 = vld [vmem:[#allocation5 + $0x1c0] sm:$0xff]
    %v601 = vld [vmem:[#allocation5 + $0x1c8] sm:$0xff]
    %v602 = vld [vmem:[#allocation5 + $0x1d0] sm:$0xff]
    %v603 = vld [vmem:[#allocation5 + $0x1d8] sm:$0xff]
    %v604 = vld [vmem:[#allocation5 + $0x1e0] sm:$0xff]
    %v605 = vld [vmem:[#allocation5 + $0x1e8] sm:$0xff]
    %v606 = vld [vmem:[#allocation5 + $0x1f0] sm:$0xff]
    %v607 = vld [vmem:[#allocation5 + $0x1f8] sm:$0xff]
    %v608 = vld [vmem:[%s13] sm:$0x3]
    %v610 = vlaneseq
    %v611 = vshrl.u32 %v610, 7
    %v612 = vsub.s32 0, %v611
    %v613 = vrot.slane %v608, %v612
    %v614 = vlaneseq
    %v615 = vshrl.u32 %v614, 7
    %v616 = vsub.s32 1, %v615
    %v617 = vrot.slane %v608, %v616
    %620 = vmatprep.subr.mxu0 %v575
    %621 = vmatpush1.msra.mxu0 %v574
    %622 = vmatprep.subr.mxu0 %v573
    %623 = vmatpush1.msra.mxu0 %v572
    %624 = vmatprep.subr.mxu0 %v571
    %625 = vmatpush1.msra.mxu0 %v570
    %626 = vmatprep.subr.mxu0 %v569
    %627 = vmatpush1.msra.mxu0 %v568
    %628 = vmatprep.subr.mxu0 %v567
    %629 = vmatpush1.msra.mxu0 %v566
    %630 = vmatprep.subr.mxu0 %v565
    %631 = vmatpush1.msra.mxu0 %v564
    %632 = vmatprep.subr.mxu0 %v563
    %633 = vmatpush1.msra.mxu0 %v562
    %634 = vmatprep.subr.mxu0 %v561
    %635 = vmatpush1.msra.mxu0 %v560
    %636 = vmatprep.subr.mxu0 %v559
    %637 = vmatpush1.msra.mxu0 %v558
    %638 = vmatprep.subr.mxu0 %v557
    %639 = vmatpush1.msra.mxu0 %v556
    %640 = vmatprep.subr.mxu0 %v555
    %641 = vmatpush1.msra.mxu0 %v554
    %642 = vmatprep.subr.mxu0 %v553
    %643 = vmatpush1.msra.mxu0 %v552
    %644 = vmatprep.subr.mxu0 %v551
    %645 = vmatpush1.msra.mxu0 %v550
    %646 = vmatprep.subr.mxu0 %v549
    %647 = vmatpush1.msra.mxu0 %v548
    %648 = vmatprep.subr.mxu0 %v547
    %649 = vmatpush1.msra.mxu0 %v546
    %650 = vmatprep.subr.mxu0 %v545
    %651 = vmatpush1.msra.mxu0 %v544
    %652 = vmatprep.subr.mxu0 %v607
    %653 = vmatpush2.msra.mxu0 %v606
    %654 = vmatprep.subr.mxu0 %v605
    %655 = vmatpush2.msra.mxu0 %v604
    %656 = vmatprep.subr.mxu0 %v603
    %657 = vmatpush2.msra.mxu0 %v602
    %658 = vmatprep.subr.mxu0 %v601
    %659 = vmatpush2.msra.mxu0 %v600
    %660 = vmatprep.subr.mxu0 %v599
    %661 = vmatpush2.msra.mxu0 %v598
    %662 = vmatprep.subr.mxu0 %v597
    %663 = vmatpush2.msra.mxu0 %v596
    %664 = vmatprep.subr.mxu0 %v595
    %665 = vmatpush2.msra.mxu0 %v594
    %666 = vmatprep.subr.mxu0 %v593
    %667 = vmatpush2.msra.mxu0 %v592
    %668 = vmatprep.subr.mxu0 %v591
    %669 = vmatpush2.msra.mxu0 %v590
    %670 = vmatprep.subr.mxu0 %v589
    %671 = vmatpush2.msra.mxu0 %v588
    %672 = vmatprep.subr.mxu0 %v587
    %673 = vmatpush2.msra.mxu0 %v586
    %674 = vmatprep.subr.mxu0 %v585
    %675 = vmatpush2.msra.mxu0 %v584
    %676 = vmatprep.subr.mxu0 %v583
    %677 = vmatpush2.msra.mxu0 %v582
    %678 = vmatprep.subr.mxu0 %v581
    %679 = vmatpush2.msra.mxu0 %v580
    %680 = vmatprep.subr.mxu0 %v579
    %681 = vmatpush2.msra.mxu0 %v578
    %682 = vmatprep.subr.mxu0 %v577
    %683 = vmatpush2.msra.mxu0 %v576
    %684 = vmatprep.mubr.f32.mxu0 %v543
    %685 = vmatmul.mubr.f32.gmra.mxu0 %v542
    %v686 = vpop.f32.mrf.mxu0
    %v687 = vadd.f32 %v613, %v686
    %v688 = vpop.f32.mrf.mxu0
    %v689 = vadd.f32 %v617, %v688
    %690 = vdwg.mxu0
    %v691 = vadd.f32 %v288, %v687
    %v692 = vadd.f32 %v289, %v689
    %v693 = vmax.f32 %v691, 0.0
    %v694 = vmax.f32 %v692, 0.0
    %v695 = vld [vmem:[#allocation7] sm:$0xff]
    %v696 = vld [vmem:[#allocation7 + $0x8] sm:$0xff]
    %v697 = vld [vmem:[#allocation7 + $0x10] sm:$0xff]
    %v698 = vld [vmem:[#allocation7 + $0x18] sm:$0xff]
    %v699 = vld [vmem:[#allocation7 + $0x20] sm:$0xff]
    %v700 = vld [vmem:[#allocation7 + $0x28] sm:$0xff]
    %v701 = vld [vmem:[#allocation7 + $0x30] sm:$0xff]
    %v702 = vld [vmem:[#allocation7 + $0x38] sm:$0xff]
    %v703 = vld [vmem:[#allocation7 + $0x40] sm:$0xff]
    %v704 = vld [vmem:[#allocation7 + $0x48] sm:$0xff]
    %v705 = vld [vmem:[#allocation7 + $0x50] sm:$0xff]
    %v706 = vld [vmem:[#allocation7 + $0x58] sm:$0xff]
    %v707 = vld [vmem:[#allocation7 + $0x60] sm:$0xff]
    %v708 = vld [vmem:[#allocation7 + $0x68] sm:$0xff]
    %v709 = vld [vmem:[#allocation7 + $0x70] sm:$0xff]
    %v710 = vld [vmem:[#allocation7 + $0x78] sm:$0xff]
    %v711 = vld [vmem:[#allocation7 + $0x80] sm:$0xff]
    %v712 = vld [vmem:[#allocation7 + $0x88] sm:$0xff]
    %v713 = vld [vmem:[#allocation7 + $0x90] sm:$0xff]
    %v714 = vld [vmem:[#allocation7 + $0x98] sm:$0xff]
    %v715 = vld [vmem:[#allocation7 + $0xa0] sm:$0xff]
    %v716 = vld [vmem:[#allocation7 + $0xa8] sm:$0xff]
    %v717 = vld [vmem:[#allocation7 + $0xb0] sm:$0xff]
    %v718 = vld [vmem:[#allocation7 + $0xb8] sm:$0xff]
    %v719 = vld [vmem:[#allocation7 + $0xc0] sm:$0xff]
    %v720 = vld [vmem:[#allocation7 + $0xc8] sm:$0xff]
    %v721 = vld [vmem:[#allocation7 + $0xd0] sm:$0xff]
    %v722 = vld [vmem:[#allocation7 + $0xd8] sm:$0xff]
    %v723 = vld [vmem:[#allocation7 + $0xe0] sm:$0xff]
    %v724 = vld [vmem:[#allocation7 + $0xe8] sm:$0xff]
    %v725 = vld [vmem:[#allocation7 + $0xf0] sm:$0xff]
    %v726 = vld [vmem:[#allocation7 + $0xf8] sm:$0xff]
    %v727 = vld [vmem:[#allocation7 + $0x100] sm:$0xff]
    %v728 = vld [vmem:[#allocation7 + $0x108] sm:$0xff]
    %v729 = vld [vmem:[#allocation7 + $0x110] sm:$0xff]
    %v730 = vld [vmem:[#allocation7 + $0x118] sm:$0xff]
    %v731 = vld [vmem:[#allocation7 + $0x120] sm:$0xff]
    %v732 = vld [vmem:[#allocation7 + $0x128] sm:$0xff]
    %v733 = vld [vmem:[#allocation7 + $0x130] sm:$0xff]
    %v734 = vld [vmem:[#allocation7 + $0x138] sm:$0xff]
    %v735 = vld [vmem:[#allocation7 + $0x140] sm:$0xff]
    %v736 = vld [vmem:[#allocation7 + $0x148] sm:$0xff]
    %v737 = vld [vmem:[#allocation7 + $0x150] sm:$0xff]
    %v738 = vld [vmem:[#allocation7 + $0x158] sm:$0xff]
    %v739 = vld [vmem:[#allocation7 + $0x160] sm:$0xff]
    %v740 = vld [vmem:[#allocation7 + $0x168] sm:$0xff]
    %v741 = vld [vmem:[#allocation7 + $0x170] sm:$0xff]
    %v742 = vld [vmem:[#allocation7 + $0x178] sm:$0xff]
    %v743 = vld [vmem:[#allocation7 + $0x180] sm:$0xff]
    %v744 = vld [vmem:[#allocation7 + $0x188] sm:$0xff]
    %v745 = vld [vmem:[#allocation7 + $0x190] sm:$0xff]
    %v746 = vld [vmem:[#allocation7 + $0x198] sm:$0xff]
    %v747 = vld [vmem:[#allocation7 + $0x1a0] sm:$0xff]
    %v748 = vld [vmem:[#allocation7 + $0x1a8] sm:$0xff]
    %v749 = vld [vmem:[#allocation7 + $0x1b0] sm:$0xff]
    %v750 = vld [vmem:[#allocation7 + $0x1b8] sm:$0xff]
    %v751 = vld [vmem:[#allocation7 + $0x1c0] sm:$0xff]
    %v752 = vld [vmem:[#allocation7 + $0x1c8] sm:$0xff]
    %v753 = vld [vmem:[#allocation7 + $0x1d0] sm:$0xff]
    %v754 = vld [vmem:[#allocation7 + $0x1d8] sm:$0xff]
    %v755 = vld [vmem:[#allocation7 + $0x1e0] sm:$0xff]
    %v756 = vld [vmem:[#allocation7 + $0x1e8] sm:$0xff]
    %v757 = vld [vmem:[#allocation7 + $0x1f0] sm:$0xff]
    %v758 = vld [vmem:[#allocation7 + $0x1f8] sm:$0xff]
    %v759 = vld [vmem:[%s17] sm:$0x3]
    %v761 = vlaneseq
    %v762 = vshrl.u32 %v761, 7
    %v763 = vsub.s32 0, %v762
    %v764 = vrot.slane %v759, %v763
    %v765 = vlaneseq
    %v766 = vshrl.u32 %v765, 7
    %v767 = vsub.s32 1, %v766
    %v768 = vrot.slane %v759, %v767
    %771 = vmatprep.subr.mxu0 %v726
    %772 = vmatpush1.msra.mxu0 %v725
    %773 = vmatprep.subr.mxu0 %v724
    %774 = vmatpush1.msra.mxu0 %v723
    %775 = vmatprep.subr.mxu0 %v722
    %776 = vmatpush1.msra.mxu0 %v721
    %777 = vmatprep.subr.mxu0 %v720
    %778 = vmatpush1.msra.mxu0 %v719
    %779 = vmatprep.subr.mxu0 %v718
    %780 = vmatpush1.msra.mxu0 %v717
    %781 = vmatprep.subr.mxu0 %v716
    %782 = vmatpush1.msra.mxu0 %v715
    %783 = vmatprep.subr.mxu0 %v714
    %784 = vmatpush1.msra.mxu0 %v713
    %785 = vmatprep.subr.mxu0 %v712
    %786 = vmatpush1.msra.mxu0 %v711
    %787 = vmatprep.subr.mxu0 %v710
    %788 = vmatpush1.msra.mxu0 %v709
    %789 = vmatprep.subr.mxu0 %v708
    %790 = vmatpush1.msra.mxu0 %v707
    %791 = vmatprep.subr.mxu0 %v706
    %792 = vmatpush1.msra.mxu0 %v705
    %793 = vmatprep.subr.mxu0 %v704
    %794 = vmatpush1.msra.mxu0 %v703
    %795 = vmatprep.subr.mxu0 %v702
    %796 = vmatpush1.msra.mxu0 %v701
    %797 = vmatprep.subr.mxu0 %v700
    %798 = vmatpush1.msra.mxu0 %v699
    %799 = vmatprep.subr.mxu0 %v698
    %800 = vmatpush1.msra.mxu0 %v697
    %801 = vmatprep.subr.mxu0 %v696
    %802 = vmatpush1.msra.mxu0 %v695
    %803 = vmatprep.subr.mxu0 %v758
    %804 = vmatpush2.msra.mxu0 %v757
    %805 = vmatprep.subr.mxu0 %v756
    %806 = vmatpush2.msra.mxu0 %v755
    %807 = vmatprep.subr.mxu0 %v754
    %808 = vmatpush2.msra.mxu0 %v753
    %809 = vmatprep.subr.mxu0 %v752
    %810 = vmatpush2.msra.mxu0 %v751
    %811 = vmatprep.subr.mxu0 %v750
    %812 = vmatpush2.msra.mxu0 %v749
    %813 = vmatprep.subr.mxu0 %v748
    %814 = vmatpush2.msra.mxu0 %v747
    %815 = vmatprep.subr.mxu0 %v746
    %816 = vmatpush2.msra.mxu0 %v745
    %817 = vmatprep.subr.mxu0 %v744
    %818 = vmatpush2.msra.mxu0 %v743
    %819 = vmatprep.subr.mxu0 %v742
    %820 = vmatpush2.msra.mxu0 %v741
    %821 = vmatprep.subr.mxu0 %v740
    %822 = vmatpush2.msra.mxu0 %v739
    %823 = vmatprep.subr.mxu0 %v738
    %824 = vmatpush2.msra.mxu0 %v737
    %825 = vmatprep.subr.mxu0 %v736
    %826 = vmatpush2.msra.mxu0 %v735
    %827 = vmatprep.subr.mxu0 %v734
    %828 = vmatpush2.msra.mxu0 %v733
    %829 = vmatprep.subr.mxu0 %v732
    %830 = vmatpush2.msra.mxu0 %v731
    %831 = vmatprep.subr.mxu0 %v730
    %832 = vmatpush2.msra.mxu0 %v729
    %833 = vmatprep.subr.mxu0 %v728
    %834 = vmatpush2.msra.mxu0 %v727
    %835 = vmatprep.mubr.f32.mxu0 %v694
    %836 = vmatmul.mubr.f32.gmra.mxu0 %v693
    %v837 = vpop.f32.mrf.mxu0
    %v838 = vadd.f32 %v764, %v837
    %v839 = vpop.f32.mrf.mxu0
    %v840 = vadd.f32 %v768, %v839
    %841 = vdwg.mxu0
    %v842 = vrot.slane %v838, 4
    %v843 = vadd.f32 %v838, %v842
    %v844 = vrot.slane %v843, 2
    %v845 = vadd.f32 %v843, %v844
    %v846 = vrot.slane %v845, 1
    %v847 = vadd.f32 %v845, %v846
    %v848 = vrot.slane %v840, 4
    %v849 = vadd.f32 %v840, %v848
    %v850 = vrot.slane %v849, 2
    %v851 = vadd.f32 %v849, %v850
    %v852 = vrot.slane %v851, 1
    %v853 = vadd.f32 %v851, %v852
    %v854 = vmul.f32 %v847, %v449
    %v855 = vmul.f32 %v853, %v449
    %v856 = vsub.f32 %v838, %v854
    %v857 = vsub.f32 %v840, %v855
    %v858 = vmul.f32 %v856, %v856
    %v859 = vmul.f32 %v857, %v857
    %v860 = vrot.slane %v858, 4
    %v861 = vadd.f32 %v858, %v860
    %v862 = vrot.slane %v861, 2
    %v863 = vadd.f32 %v861, %v862
    %v864 = vrot.slane %v863, 1
    %v865 = vadd.f32 %v863, %v864
    %v866 = vrot.slane %v859, 4
    %v867 = vadd.f32 %v859, %v866
    %v868 = vrot.slane %v867, 2
    %v869 = vadd.f32 %v867, %v868
    %v870 = vrot.slane %v869, 1
    %v871 = vadd.f32 %v869, %v870
    %v872 = vmul.f32 %v865, %v449
    %v873 = vmul.f32 %v871, %v449
    %v874 = vld [vmem:[%s19] sm:$0x3]
    %v875 = vadd.f32 %v872, 1e-05
    %v876 = vadd.f32 %v873, 1e-05
    %v877 = vrsqrt.pop %v875
    %v878 = vrsqrt.pop %v876
    %v881 = vcombine.low %v877, %v878
    %v883 = vunpack.c.l.s4 1966171168
    %v884 = vunpack.c.0.s8 %v883
    %v885 = vlaneseq
    %v886 = vshrl.u32 %v885, 7
    %v887 = vsub.s32 %v884, %v886
    %v888 = vrot.slane %v881, %v887
    %v890 = vunpack.c.l.s4 1966171168
    %v891 = vunpack.c.0.s8 %v890
    %v892 = vlaneseq
    %v893 = vshrl.u32 %v892, 7
    %v894 = vsub.s32 %v891, %v893
    %v895 = vrot.slane %v888, %v894
    %v897 = vmul.f32 %v874, %v895
    %v898 = vld [vmem:[%s21] sm:$0x3]
    %v900 = vlaneseq
    %v901 = vshrl.u32 %v900, 7
    %v902 = vsub.s32 0, %v901
    %v903 = vrot.slane %v897, %v902
    %v904 = vlaneseq
    %v905 = vshrl.u32 %v904, 7
    %v906 = vsub.s32 1, %v905
    %v907 = vrot.slane %v897, %v906
    %v910 = vmul.f32 %v854, %v903
    %v911 = vmul.f32 %v855, %v907
    %v914 = vcombine.low %v910, %v911
    %v916 = vunpack.c.l.s4 1966171168
    %v917 = vunpack.c.0.s8 %v916
    %v918 = vlaneseq
    %v919 = vshrl.u32 %v918, 7
    %v920 = vsub.s32 %v917, %v919
    %v921 = vrot.slane %v914, %v920
    %v923 = vunpack.c.l.s4 1966171168
    %v924 = vunpack.c.0.s8 %v923
    %v925 = vlaneseq
    %v926 = vshrl.u32 %v925, 7
    %v927 = vsub.s32 %v924, %v926
    %v928 = vrot.slane %v921, %v927
    %v930 = vsub.f32 %v898, %v928
    %v931 = vmul.f32 %v838, %v903
    %v932 = vmul.f32 %v840, %v907
    %v934 = vlaneseq
    %v935 = vshrl.u32 %v934, 7
    %v936 = vsub.s32 0, %v935
    %v937 = vrot.slane %v930, %v936
    %v938 = vlaneseq
    %v939 = vshrl.u32 %v938, 7
    %v940 = vsub.s32 1, %v939
    %v941 = vrot.slane %v930, %v940
    %v944 = vadd.f32 %v931, %v937
    %v945 = vadd.f32 %v932, %v941
    %v946 = vmax.f32 %v944, 0.0
    %v947 = vmax.f32 %v945, 0.0
    %v948 = vld [vmem:[#allocation8] sm:$0xff]
    %v949 = vld [vmem:[#allocation8 + $0x8] sm:$0xff]
    %v950 = vld [vmem:[#allocation8 + $0x10] sm:$0xff]
    %v951 = vld [vmem:[#allocation8 + $0x18] sm:$0xff]
    %v952 = vld [vmem:[#allocation8 + $0x20] sm:$0xff]
    %v953 = vld [vmem:[#allocation8 + $0x28] sm:$0xff]
    %v954 = vld [vmem:[#allocation8 + $0x30] sm:$0xff]
    %v955 = vld [vmem:[#allocation8 + $0x38] sm:$0xff]
    %v956 = vld [vmem:[#allocation8 + $0x40] sm:$0xff]
    %v957 = vld [vmem:[#allocation8 + $0x48] sm:$0xff]
    %v958 = vld [vmem:[#allocation8 + $0x50] sm:$0xff]
    %v959 = vld [vmem:[#allocation8 + $0x58] sm:$0xff]
    %v960 = vld [vmem:[#allocation8 + $0x60] sm:$0xff]
    %v961 = vld [vmem:[#allocation8 + $0x68] sm:$0xff]
    %v962 = vld [vmem:[#allocation8 + $0x70] sm:$0xff]
    %v963 = vld [vmem:[#allocation8 + $0x78] sm:$0xff]
    %v964 = vld [vmem:[#allocation8 + $0x80] sm:$0xff]
    %v965 = vld [vmem:[#allocation8 + $0x88] sm:$0xff]
    %v966 = vld [vmem:[#allocation8 + $0x90] sm:$0xff]
    %v967 = vld [vmem:[#allocation8 + $0x98] sm:$0xff]
    %v968 = vld [vmem:[#allocation8 + $0xa0] sm:$0xff]
    %v969 = vld [vmem:[#allocation8 + $0xa8] sm:$0xff]
    %v970 = vld [vmem:[#allocation8 + $0xb0] sm:$0xff]
    %v971 = vld [vmem:[#allocation8 + $0xb8] sm:$0xff]
    %v972 = vld [vmem:[#allocation8 + $0xc0] sm:$0xff]
    %v973 = vld [vmem:[#allocation8 + $0xc8] sm:$0xff]
    %v974 = vld [vmem:[#allocation8 + $0xd0] sm:$0xff]
    %v975 = vld [vmem:[#allocation8 + $0xd8] sm:$0xff]
    %v976 = vld [vmem:[#allocation8 + $0xe0] sm:$0xff]
    %v977 = vld [vmem:[#allocation8 + $0xe8] sm:$0xff]
    %v978 = vld [vmem:[#allocation8 + $0xf0] sm:$0xff]
    %v979 = vld [vmem:[#allocation8 + $0xf8] sm:$0xff]
    %v980 = vld [vmem:[#allocation8 + $0x100] sm:$0xff]
    %v981 = vld [vmem:[#allocation8 + $0x108] sm:$0xff]
    %v982 = vld [vmem:[#allocation8 + $0x110] sm:$0xff]
    %v983 = vld [vmem:[#allocation8 + $0x118] sm:$0xff]
    %v984 = vld [vmem:[#allocation8 + $0x120] sm:$0xff]
    %v985 = vld [vmem:[#allocation8 + $0x128] sm:$0xff]
    %v986 = vld [vmem:[#allocation8 + $0x130] sm:$0xff]
    %v987 = vld [vmem:[#allocation8 + $0x138] sm:$0xff]
    %v988 = vld [vmem:[#allocation8 + $0x140] sm:$0xff]
    %v989 = vld [vmem:[#allocation8 + $0x148] sm:$0xff]
    %v990 = vld [vmem:[#allocation8 + $0x150] sm:$0xff]
    %v991 = vld [vmem:[#allocation8 + $0x158] sm:$0xff]
    %v992 = vld [vmem:[#allocation8 + $0x160] sm:$0xff]
    %v993 = vld [vmem:[#allocation8 + $0x168] sm:$0xff]
    %v994 = vld [vmem:[#allocation8 + $0x170] sm:$0xff]
    %v995 = vld [vmem:[#allocation8 + $0x178] sm:$0xff]
    %v996 = vld [vmem:[#allocation8 + $0x180] sm:$0xff]
    %v997 = vld [vmem:[#allocation8 + $0x188] sm:$0xff]
    %v998 = vld [vmem:[#allocation8 + $0x190] sm:$0xff]
    %v999 = vld [vmem:[#allocation8 + $0x198] sm:$0xff]
    %v1000 = vld [vmem:[#allocation8 + $0x1a0] sm:$0xff]
    %v1001 = vld [vmem:[#allocation8 + $0x1a8] sm:$0xff]
    %v1002 = vld [vmem:[#allocation8 + $0x1b0] sm:$0xff]
    %v1003 = vld [vmem:[#allocation8 + $0x1b8] sm:$0xff]
    %v1004 = vld [vmem:[#allocation8 + $0x1c0] sm:$0xff]
    %v1005 = vld [vmem:[#allocation8 + $0x1c8] sm:$0xff]
    %v1006 = vld [vmem:[#allocation8 + $0x1d0] sm:$0xff]
    %v1007 = vld [vmem:[#allocation8 + $0x1d8] sm:$0xff]
    %v1008 = vld [vmem:[#allocation8 + $0x1e0] sm:$0xff]
    %v1009 = vld [vmem:[#allocation8 + $0x1e8] sm:$0xff]
    %v1010 = vld [vmem:[#allocation8 + $0x1f0] sm:$0xff]
    %v1011 = vld [vmem:[#allocation8 + $0x1f8] sm:$0xff]
    %v1012 = vld [vmem:[%s25] sm:$0x3]
    %v1014 = vlaneseq
    %v1015 = vshrl.u32 %v1014, 7
    %v1016 = vsub.s32 0, %v1015
    %v1017 = vrot.slane %v1012, %v1016
    %v1018 = vlaneseq
    %v1019 = vshrl.u32 %v1018, 7
    %v1020 = vsub.s32 1, %v1019
    %v1021 = vrot.slane %v1012, %v1020
    %1024 = vmatprep.subr.mxu0 %v979
    %1025 = vmatpush1.msra.mxu0 %v978
    %1026 = vmatprep.subr.mxu0 %v977
    %1027 = vmatpush1.msra.mxu0 %v976
    %1028 = vmatprep.subr.mxu0 %v975
    %1029 = vmatpush1.msra.mxu0 %v974
    %1030 = vmatprep.subr.mxu0 %v973
    %1031 = vmatpush1.msra.mxu0 %v972
    %1032 = vmatprep.subr.mxu0 %v971
    %1033 = vmatpush1.msra.mxu0 %v970
    %1034 = vmatprep.subr.mxu0 %v969
    %1035 = vmatpush1.msra.mxu0 %v968
    %1036 = vmatprep.subr.mxu0 %v967
    %1037 = vmatpush1.msra.mxu0 %v966
    %1038 = vmatprep.subr.mxu0 %v965
    %1039 = vmatpush1.msra.mxu0 %v964
    %1040 = vmatprep.subr.mxu0 %v963
    %1041 = vmatpush1.msra.mxu0 %v962
    %1042 = vmatprep.subr.mxu0 %v961
    %1043 = vmatpush1.msra.mxu0 %v960
    %1044 = vmatprep.subr.mxu0 %v959
    %1045 = vmatpush1.msra.mxu0 %v958
    %1046 = vmatprep.subr.mxu0 %v957
    %1047 = vmatpush1.msra.mxu0 %v956
    %1048 = vmatprep.subr.mxu0 %v955
    %1049 = vmatpush1.msra.mxu0 %v954
    %1050 = vmatprep.subr.mxu0 %v953
    %1051 = vmatpush1.msra.mxu0 %v952
    %1052 = vmatprep.subr.mxu0 %v951
    %1053 = vmatpush1.msra.mxu0 %v950
    %1054 = vmatprep.subr.mxu0 %v949
    %1055 = vmatpush1.msra.mxu0 %v948
    %1056 = vmatprep.subr.mxu0 %v1011
    %1057 = vmatpush2.msra.mxu0 %v1010
    %1058 = vmatprep.subr.mxu0 %v1009
    %1059 = vmatpush2.msra.mxu0 %v1008
    %1060 = vmatprep.subr.mxu0 %v1007
    %1061 = vmatpush2.msra.mxu0 %v1006
    %1062 = vmatprep.subr.mxu0 %v1005
    %1063 = vmatpush2.msra.mxu0 %v1004
    %1064 = vmatprep.subr.mxu0 %v1003
    %1065 = vmatpush2.msra.mxu0 %v1002
    %1066 = vmatprep.subr.mxu0 %v1001
    %1067 = vmatpush2.msra.mxu0 %v1000
    %1068 = vmatprep.subr.mxu0 %v999
    %1069 = vmatpush2.msra.mxu0 %v998
    %1070 = vmatprep.subr.mxu0 %v997
    %1071 = vmatpush2.msra.mxu0 %v996
    %1072 = vmatprep.subr.mxu0 %v995
    %1073 = vmatpush2.msra.mxu0 %v994
    %1074 = vmatprep.subr.mxu0 %v993
    %1075 = vmatpush2.msra.mxu0 %v992
    %1076 = vmatprep.subr.mxu0 %v991
    %1077 = vmatpush2.msra.mxu0 %v990
    %1078 = vmatprep.subr.mxu0 %v989
    %1079 = vmatpush2.msra.mxu0 %v988
    %1080 = vmatprep.subr.mxu0 %v987
    %1081 = vmatpush2.msra.mxu0 %v986
    %1082 = vmatprep.subr.mxu0 %v985
    %1083 = vmatpush2.msra.mxu0 %v984
    %1084 = vmatprep.subr.mxu0 %v983
    %1085 = vmatpush2.msra.mxu0 %v982
    %1086 = vmatprep.subr.mxu0 %v981
    %1087 = vmatpush2.msra.mxu0 %v980
    %1088 = vmatprep.mubr.f32.mxu0 %v947
    %1089 = vmatmul.mubr.f32.gmra.mxu0 %v946
    %v1090 = vpop.f32.mrf.mxu0
    %v1091 = vadd.f32 %v1017, %v1090
    %v1092 = vpop.f32.mrf.mxu0
    %v1093 = vadd.f32 %v1021, %v1092
    %1094 = vdwg.mxu0
    %v1095 = vadd.f32 %v693, %v1091
    %v1096 = vadd.f32 %v694, %v1093
    %v1097 = vmax.f32 %v1095, 0.0
    %v1098 = vmax.f32 %v1096, 0.0
    %v1099 = vld [vmem:[#allocation10] sm:$0xff]
    %v1100 = vld [vmem:[#allocation10 + $0x8] sm:$0xff]
    %v1101 = vld [vmem:[#allocation10 + $0x10] sm:$0xff]
    %v1102 = vld [vmem:[#allocation10 + $0x18] sm:$0xff]
    %v1103 = vld [vmem:[#allocation10 + $0x20] sm:$0xff]
    %v1104 = vld [vmem:[#allocation10 + $0x28] sm:$0xff]
    %v1105 = vld [vmem:[#allocation10 + $0x30] sm:$0xff]
    %v1106 = vld [vmem:[#allocation10 + $0x38] sm:$0xff]
    %v1107 = vld [vmem:[#allocation10 + $0x40] sm:$0xff]
    %v1108 = vld [vmem:[#allocation10 + $0x48] sm:$0xff]
    %v1109 = vld [vmem:[#allocation10 + $0x50] sm:$0xff]
    %v1110 = vld [vmem:[#allocation10 + $0x58] sm:$0xff]
    %v1111 = vld [vmem:[#allocation10 + $0x60] sm:$0xff]
    %v1112 = vld [vmem:[#allocation10 + $0x68] sm:$0xff]
    %v1113 = vld [vmem:[#allocation10 + $0x70] sm:$0xff]
    %v1114 = vld [vmem:[#allocation10 + $0x78] sm:$0xff]
    %v1115 = vld [vmem:[#allocation10 + $0x80] sm:$0xff]
    %v1116 = vld [vmem:[#allocation10 + $0x88] sm:$0xff]
    %v1117 = vld [vmem:[#allocation10 + $0x90] sm:$0xff]
    %v1118 = vld [vmem:[#allocation10 + $0x98] sm:$0xff]
    %v1119 = vld [vmem:[#allocation10 + $0xa0] sm:$0xff]
    %v1120 = vld [vmem:[#allocation10 + $0xa8] sm:$0xff]
    %v1121 = vld [vmem:[#allocation10 + $0xb0] sm:$0xff]
    %v1122 = vld [vmem:[#allocation10 + $0xb8] sm:$0xff]
    %v1123 = vld [vmem:[#allocation10 + $0xc0] sm:$0xff]
    %v1124 = vld [vmem:[#allocation10 + $0xc8] sm:$0xff]
    %v1125 = vld [vmem:[#allocation10 + $0xd0] sm:$0xff]
    %v1126 = vld [vmem:[#allocation10 + $0xd8] sm:$0xff]
    %v1127 = vld [vmem:[#allocation10 + $0xe0] sm:$0xff]
    %v1128 = vld [vmem:[#allocation10 + $0xe8] sm:$0xff]
    %v1129 = vld [vmem:[#allocation10 + $0xf0] sm:$0xff]
    %v1130 = vld [vmem:[#allocation10 + $0xf8] sm:$0xff]
    %v1131 = vld [vmem:[#allocation10 + $0x100] sm:$0xff]
    %v1132 = vld [vmem:[#allocation10 + $0x108] sm:$0xff]
    %v1133 = vld [vmem:[#allocation10 + $0x110] sm:$0xff]
    %v1134 = vld [vmem:[#allocation10 + $0x118] sm:$0xff]
    %v1135 = vld [vmem:[#allocation10 + $0x120] sm:$0xff]
    %v1136 = vld [vmem:[#allocation10 + $0x128] sm:$0xff]
    %v1137 = vld [vmem:[#allocation10 + $0x130] sm:$0xff]
    %v1138 = vld [vmem:[#allocation10 + $0x138] sm:$0xff]
    %v1139 = vld [vmem:[#allocation10 + $0x140] sm:$0xff]
    %v1140 = vld [vmem:[#allocation10 + $0x148] sm:$0xff]
    %v1141 = vld [vmem:[#allocation10 + $0x150] sm:$0xff]
    %v1142 = vld [vmem:[#allocation10 + $0x158] sm:$0xff]
    %v1143 = vld [vmem:[#allocation10 + $0x160] sm:$0xff]
    %v1144 = vld [vmem:[#allocation10 + $0x168] sm:$0xff]
    %v1145 = vld [vmem:[#allocation10 + $0x170] sm:$0xff]
    %v1146 = vld [vmem:[#allocation10 + $0x178] sm:$0xff]
    %v1147 = vld [vmem:[#allocation10 + $0x180] sm:$0xff]
    %v1148 = vld [vmem:[#allocation10 + $0x188] sm:$0xff]
    %v1149 = vld [vmem:[#allocation10 + $0x190] sm:$0xff]
    %v1150 = vld [vmem:[#allocation10 + $0x198] sm:$0xff]
    %v1151 = vld [vmem:[#allocation10 + $0x1a0] sm:$0xff]
    %v1152 = vld [vmem:[#allocation10 + $0x1a8] sm:$0xff]
    %v1153 = vld [vmem:[#allocation10 + $0x1b0] sm:$0xff]
    %v1154 = vld [vmem:[#allocation10 + $0x1b8] sm:$0xff]
    %v1155 = vld [vmem:[#allocation10 + $0x1c0] sm:$0xff]
    %v1156 = vld [vmem:[#allocation10 + $0x1c8] sm:$0xff]
    %v1157 = vld [vmem:[#allocation10 + $0x1d0] sm:$0xff]
    %v1158 = vld [vmem:[#allocation10 + $0x1d8] sm:$0xff]
    %v1159 = vld [vmem:[#allocation10 + $0x1e0] sm:$0xff]
    %v1160 = vld [vmem:[#allocation10 + $0x1e8] sm:$0xff]
    %v1161 = vld [vmem:[#allocation10 + $0x1f0] sm:$0xff]
    %v1162 = vld [vmem:[#allocation10 + $0x1f8] sm:$0xff]
    %v1163 = vld [vmem:[%s29] sm:$0x3]
    %v1165 = vlaneseq
    %v1166 = vshrl.u32 %v1165, 7
    %v1167 = vsub.s32 0, %v1166
    %v1168 = vrot.slane %v1163, %v1167
    %v1169 = vlaneseq
    %v1170 = vshrl.u32 %v1169, 7
    %v1171 = vsub.s32 1, %v1170
    %v1172 = vrot.slane %v1163, %v1171
    %1175 = vmatprep.subr.mxu0 %v1130
    %1176 = vmatpush1.msra.mxu0 %v1129
    %1177 = vmatprep.subr.mxu0 %v1128
    %1178 = vmatpush1.msra.mxu0 %v1127
    %1179 = vmatprep.subr.mxu0 %v1126
    %1180 = vmatpush1.msra.mxu0 %v1125
    %1181 = vmatprep.subr.mxu0 %v1124
    %1182 = vmatpush1.msra.mxu0 %v1123
    %1183 = vmatprep.subr.mxu0 %v1122
    %1184 = vmatpush1.msra.mxu0 %v1121
    %1185 = vmatprep.subr.mxu0 %v1120
    %1186 = vmatpush1.msra.mxu0 %v1119
    %1187 = vmatprep.subr.mxu0 %v1118
    %1188 = vmatpush1.msra.mxu0 %v1117
    %1189 = vmatprep.subr.mxu0 %v1116
    %1190 = vmatpush1.msra.mxu0 %v1115
    %1191 = vmatprep.subr.mxu0 %v1114
    %1192 = vmatpush1.msra.mxu0 %v1113
    %1193 = vmatprep.subr.mxu0 %v1112
    %1194 = vmatpush1.msra.mxu0 %v1111
    %1195 = vmatprep.subr.mxu0 %v1110
    %1196 = vmatpush1.msra.mxu0 %v1109
    %1197 = vmatprep.subr.mxu0 %v1108
    %1198 = vmatpush1.msra.mxu0 %v1107
    %1199 = vmatprep.subr.mxu0 %v1106
    %1200 = vmatpush1.msra.mxu0 %v1105
    %1201 = vmatprep.subr.mxu0 %v1104
    %1202 = vmatpush1.msra.mxu0 %v1103
    %1203 = vmatprep.subr.mxu0 %v1102
    %1204 = vmatpush1.msra.mxu0 %v1101
    %1205 = vmatprep.subr.mxu0 %v1100
    %1206 = vmatpush1.msra.mxu0 %v1099
    %1207 = vmatprep.subr.mxu0 %v1162
    %1208 = vmatpush2.msra.mxu0 %v1161
    %1209 = vmatprep.subr.mxu0 %v1160
    %1210 = vmatpush2.msra.mxu0 %v1159
    %1211 = vmatprep.subr.mxu0 %v1158
    %1212 = vmatpush2.msra.mxu0 %v1157
    %1213 = vmatprep.subr.mxu0 %v1156
    %1214 = vmatpush2.msra.mxu0 %v1155
    %1215 = vmatprep.subr.mxu0 %v1154
    %1216 = vmatpush2.msra.mxu0 %v1153
    %1217 = vmatprep.subr.mxu0 %v1152
    %1218 = vmatpush2.msra.mxu0 %v1151
    %1219 = vmatprep.subr.mxu0 %v1150
    %1220 = vmatpush2.msra.mxu0 %v1149
    %1221 = vmatprep.subr.mxu0 %v1148
    %1222 = vmatpush2.msra.mxu0 %v1147
    %1223 = vmatprep.subr.mxu0 %v1146
    %1224 = vmatpush2.msra.mxu0 %v1145
    %1225 = vmatprep.subr.mxu0 %v1144
    %1226 = vmatpush2.msra.mxu0 %v1143
    %1227 = vmatprep.subr.mxu0 %v1142
    %1228 = vmatpush2.msra.mxu0 %v1141
    %1229 = vmatprep.subr.mxu0 %v1140
    %1230 = vmatpush2.msra.mxu0 %v1139
    %1231 = vmatprep.subr.mxu0 %v1138
    %1232 = vmatpush2.msra.mxu0 %v1137
    %1233 = vmatprep.subr.mxu0 %v1136
    %1234 = vmatpush2.msra.mxu0 %v1135
    %1235 = vmatprep.subr.mxu0 %v1134
    %1236 = vmatpush2.msra.mxu0 %v1133
    %1237 = vmatprep.subr.mxu0 %v1132
    %1238 = vmatpush2.msra.mxu0 %v1131
    %1239 = vmatprep.mubr.f32.mxu0 %v1098
    %1240 = vmatmul.mubr.f32.gmra.mxu0 %v1097
    %v1241 = vpop.f32.mrf.mxu0
    %v1242 = vadd.f32 %v1168, %v1241
    %v1243 = vpop.f32.mrf.mxu0
    %v1244 = vadd.f32 %v1172, %v1243
    %1245 = vdwg.mxu0
    %v1246 = vrot.slane %v1242, 4
    %v1247 = vadd.f32 %v1242, %v1246
    %v1248 = vrot.slane %v1247, 2
    %v1249 = vadd.f32 %v1247, %v1248
    %v1250 = vrot.slane %v1249, 1
    %v1251 = vadd.f32 %v1249, %v1250
    %v1252 = vrot.slane %v1244, 4
    %v1253 = vadd.f32 %v1244, %v1252
    %v1254 = vrot.slane %v1253, 2
    %v1255 = vadd.f32 %v1253, %v1254
    %v1256 = vrot.slane %v1255, 1
    %v1257 = vadd.f32 %v1255, %v1256
    %v1258 = vmul.f32 %v1251, %v449
    %v1259 = vmul.f32 %v1257, %v449
    %v1260 = vsub.f32 %v1242, %v1258
    %v1261 = vsub.f32 %v1244, %v1259
    %v1262 = vmul.f32 %v1260, %v1260
    %v1263 = vmul.f32 %v1261, %v1261
    %v1264 = vrot.slane %v1262, 4
    %v1265 = vadd.f32 %v1262, %v1264
    %v1266 = vrot.slane %v1265, 2
    %v1267 = vadd.f32 %v1265, %v1266
    %v1268 = vrot.slane %v1267, 1
    %v1269 = vadd.f32 %v1267, %v1268
    %v1270 = vrot.slane %v1263, 4
    %v1271 = vadd.f32 %v1263, %v1270
    %v1272 = vrot.slane %v1271, 2
    %v1273 = vadd.f32 %v1271, %v1272
    %v1274 = vrot.slane %v1273, 1
    %v1275 = vadd.f32 %v1273, %v1274
    %v1276 = vmul.f32 %v1269, %v449
    %v1277 = vmul.f32 %v1275, %v449
    %v1278 = vld [vmem:[%s31] sm:$0x3]
    %v1279 = vadd.f32 %v1276, 1e-05
    %v1280 = vadd.f32 %v1277, 1e-05
    %v1281 = vrsqrt.pop %v1279
    %v1282 = vrsqrt.pop %v1280
    %v1285 = vcombine.low %v1281, %v1282
    %v1287 = vunpack.c.l.s4 1966171168
    %v1288 = vunpack.c.0.s8 %v1287
    %v1289 = vlaneseq
    %v1290 = vshrl.u32 %v1289, 7
    %v1291 = vsub.s32 %v1288, %v1290
    %v1292 = vrot.slane %v1285, %v1291
    %v1294 = vunpack.c.l.s4 1966171168
    %v1295 = vunpack.c.0.s8 %v1294
    %v1296 = vlaneseq
    %v1297 = vshrl.u32 %v1296, 7
    %v1298 = vsub.s32 %v1295, %v1297
    %v1299 = vrot.slane %v1292, %v1298
    %v1301 = vmul.f32 %v1278, %v1299
    %v1302 = vld [vmem:[%s33] sm:$0x3]
    %v1304 = vlaneseq
    %v1305 = vshrl.u32 %v1304, 7
    %v1306 = vsub.s32 0, %v1305
    %v1307 = vrot.slane %v1301, %v1306
    %v1308 = vlaneseq
    %v1309 = vshrl.u32 %v1308, 7
    %v1310 = vsub.s32 1, %v1309
    %v1311 = vrot.slane %v1301, %v1310
    %v1314 = vmul.f32 %v1258, %v1307
    %v1315 = vmul.f32 %v1259, %v1311
    %v1318 = vcombine.low %v1314, %v1315
    %v1320 = vunpack.c.l.s4 1966171168
    %v1321 = vunpack.c.0.s8 %v1320
    %v1322 = vlaneseq
    %v1323 = vshrl.u32 %v1322, 7
    %v1324 = vsub.s32 %v1321, %v1323
    %v1325 = vrot.slane %v1318, %v1324
    %v1327 = vunpack.c.l.s4 1966171168
    %v1328 = vunpack.c.0.s8 %v1327
    %v1329 = vlaneseq
    %v1330 = vshrl.u32 %v1329, 7
    %v1331 = vsub.s32 %v1328, %v1330
    %v1332 = vrot.slane %v1325, %v1331
    %v1334 = vsub.f32 %v1302, %v1332
    %v1335 = vmul.f32 %v1242, %v1307
    %v1336 = vmul.f32 %v1244, %v1311
    %v1338 = vlaneseq
    %v1339 = vshrl.u32 %v1338, 7
    %v1340 = vsub.s32 0, %v1339
    %v1341 = vrot.slane %v1334, %v1340
    %v1342 = vlaneseq
    %v1343 = vshrl.u32 %v1342, 7
    %v1344 = vsub.s32 1, %v1343
    %v1345 = vrot.slane %v1334, %v1344
    %v1348 = vadd.f32 %v1335, %v1341
    %v1349 = vadd.f32 %v1336, %v1345
    %v1350 = vmax.f32 %v1348, 0.0
    %v1351 = vmax.f32 %v1349, 0.0
    %v1352 = vld [vmem:[#allocation11] sm:$0xff]
    %v1353 = vld [vmem:[#allocation11 + $0x8] sm:$0xff]
    %v1354 = vld [vmem:[#allocation11 + $0x10] sm:$0xff]
    %v1355 = vld [vmem:[#allocation11 + $0x18] sm:$0xff]
    %v1356 = vld [vmem:[#allocation11 + $0x20] sm:$0xff]
    %v1357 = vld [vmem:[#allocation11 + $0x28] sm:$0xff]
    %v1358 = vld [vmem:[#allocation11 + $0x30] sm:$0xff]
    %v1359 = vld [vmem:[#allocation11 + $0x38] sm:$0xff]
    %v1360 = vld [vmem:[#allocation11 + $0x40] sm:$0xff]
    %v1361 = vld [vmem:[#allocation11 + $0x48] sm:$0xff]
    %v1362 = vld [vmem:[#allocation11 + $0x50] sm:$0xff]
    %v1363 = vld [vmem:[#allocation11 + $0x58] sm:$0xff]
    %v1364 = vld [vmem:[#allocation11 + $0x60] sm:$0xff]
    %v1365 = vld [vmem:[#allocation11 + $0x68] sm:$0xff]
    %v1366 = vld [vmem:[#allocation11 + $0x70] sm:$0xff]
    %v1367 = vld [vmem:[#allocation11 + $0x78] sm:$0xff]
    %v1368 = vld [vmem:[#allocation11 + $0x80] sm:$0xff]
    %v1369 = vld [vmem:[#allocation11 + $0x88] sm:$0xff]
    %v1370 = vld [vmem:[#allocation11 + $0x90] sm:$0xff]
    %v1371 = vld [vmem:[#allocation11 + $0x98] sm:$0xff]
    %v1372 = vld [vmem:[#allocation11 + $0xa0] sm:$0xff]
    %v1373 = vld [vmem:[#allocation11 + $0xa8] sm:$0xff]
    %v1374 = vld [vmem:[#allocation11 + $0xb0] sm:$0xff]
    %v1375 = vld [vmem:[#allocation11 + $0xb8] sm:$0xff]
    %v1376 = vld [vmem:[#allocation11 + $0xc0] sm:$0xff]
    %v1377 = vld [vmem:[#allocation11 + $0xc8] sm:$0xff]
    %v1378 = vld [vmem:[#allocation11 + $0xd0] sm:$0xff]
    %v1379 = vld [vmem:[#allocation11 + $0xd8] sm:$0xff]
    %v1380 = vld [vmem:[#allocation11 + $0xe0] sm:$0xff]
    %v1381 = vld [vmem:[#allocation11 + $0xe8] sm:$0xff]
    %v1382 = vld [vmem:[#allocation11 + $0xf0] sm:$0xff]
    %v1383 = vld [vmem:[#allocation11 + $0xf8] sm:$0xff]
    %v1384 = vld [vmem:[#allocation13] sm:$0xff]
    %v1385 = vld [vmem:[#allocation13 + $0x8] sm:$0xff]
    %v1386 = vld [vmem:[#allocation13 + $0x10] sm:$0xff]
    %v1387 = vld [vmem:[#allocation13 + $0x18] sm:$0xff]
    %v1388 = vld [vmem:[#allocation13 + $0x20] sm:$0xff]
    %v1389 = vld [vmem:[#allocation13 + $0x28] sm:$0xff]
    %v1390 = vld [vmem:[#allocation13 + $0x30] sm:$0xff]
    %v1391 = vld [vmem:[#allocation13 + $0x38] sm:$0xff]
    %v1392 = vld [vmem:[#allocation13 + $0x40] sm:$0xff]
    %v1393 = vld [vmem:[#allocation13 + $0x48] sm:$0xff]
    %v1394 = vld [vmem:[#allocation13 + $0x50] sm:$0xff]
    %v1395 = vld [vmem:[#allocation13 + $0x58] sm:$0xff]
    %v1396 = vld [vmem:[#allocation13 + $0x60] sm:$0xff]
    %v1397 = vld [vmem:[#allocation13 + $0x68] sm:$0xff]
    %v1398 = vld [vmem:[#allocation13 + $0x70] sm:$0xff]
    %v1399 = vld [vmem:[#allocation13 + $0x78] sm:$0xff]
    %v1400 = vld [vmem:[#allocation13 + $0x80] sm:$0xff]
    %v1401 = vld [vmem:[#allocation13 + $0x88] sm:$0xff]
    %v1402 = vld [vmem:[#allocation13 + $0x90] sm:$0xff]
    %v1403 = vld [vmem:[#allocation13 + $0x98] sm:$0xff]
    %v1404 = vld [vmem:[#allocation13 + $0xa0] sm:$0xff]
    %v1405 = vld [vmem:[#allocation13 + $0xa8] sm:$0xff]
    %v1406 = vld [vmem:[#allocation13 + $0xb0] sm:$0xff]
    %v1407 = vld [vmem:[#allocation13 + $0xb8] sm:$0xff]
    %v1408 = vld [vmem:[#allocation13 + $0xc0] sm:$0xff]
    %v1409 = vld [vmem:[#allocation13 + $0xc8] sm:$0xff]
    %v1410 = vld [vmem:[#allocation13 + $0xd0] sm:$0xff]
    %v1411 = vld [vmem:[#allocation13 + $0xd8] sm:$0xff]
    %v1412 = vld [vmem:[#allocation13 + $0xe0] sm:$0xff]
    %v1413 = vld [vmem:[#allocation13 + $0xe8] sm:$0xff]
    %v1414 = vld [vmem:[#allocation13 + $0xf0] sm:$0xff]
    %v1415 = vld [vmem:[#allocation13 + $0xf8] sm:$0xff]
    %1416 = vmatprep.subr.mxu0 0.0
    %1417 = vmatpush1.msra.mxu0 %v1399
    %1418 = vmatprep.subr.mxu0 0.0
    %1419 = vmatpush1.msra.mxu0 %v1398
    %1420 = vmatprep.subr.mxu0 0.0
    %1421 = vmatpush1.msra.mxu0 %v1397
    %1422 = vmatprep.subr.mxu0 0.0
    %1423 = vmatpush1.msra.mxu0 %v1396
    %1424 = vmatprep.subr.mxu0 0.0
    %1425 = vmatpush1.msra.mxu0 %v1395
    %1426 = vmatprep.subr.mxu0 0.0
    %1427 = vmatpush1.msra.mxu0 %v1394
    %1428 = vmatprep.subr.mxu0 0.0
    %1429 = vmatpush1.msra.mxu0 %v1393
    %1430 = vmatprep.subr.mxu0 0.0
    %1431 = vmatpush1.msra.mxu0 %v1392
    %1432 = vmatprep.subr.mxu0 0.0
    %1433 = vmatpush1.msra.mxu0 %v1391
    %1434 = vmatprep.subr.mxu0 0.0
    %1435 = vmatpush1.msra.mxu0 %v1390
    %1436 = vmatprep.subr.mxu0 0.0
    %1437 = vmatpush1.msra.mxu0 %v1389
    %1438 = vmatprep.subr.mxu0 0.0
    %1439 = vmatpush1.msra.mxu0 %v1388
    %1440 = vmatprep.subr.mxu0 0.0
    %1441 = vmatpush1.msra.mxu0 %v1387
    %1442 = vmatprep.subr.mxu0 0.0
    %1443 = vmatpush1.msra.mxu0 %v1386
    %1444 = vmatprep.subr.mxu0 0.0
    %1445 = vmatpush1.msra.mxu0 %v1385
    %1446 = vmatprep.subr.mxu0 0.0
    %1447 = vmatpush1.msra.mxu0 %v1384
    %1448 = vmatprep.subr.mxu0 0.0
    %1449 = vmatpush2.msra.mxu0 %v1415
    %1450 = vmatprep.subr.mxu0 0.0
    %1451 = vmatpush2.msra.mxu0 %v1414
    %1452 = vmatprep.subr.mxu0 0.0
    %1453 = vmatpush2.msra.mxu0 %v1413
    %1454 = vmatprep.subr.mxu0 0.0
    %1455 = vmatpush2.msra.mxu0 %v1412
    %1456 = vmatprep.subr.mxu0 0.0
    %1457 = vmatpush2.msra.mxu0 %v1411
    %1458 = vmatprep.subr.mxu0 0.0
    %1459 = vmatpush2.msra.mxu0 %v1410
    %1460 = vmatprep.subr.mxu0 0.0
    %1461 = vmatpush2.msra.mxu0 %v1409
    %1462 = vmatprep.subr.mxu0 0.0
    %1463 = vmatpush2.msra.mxu0 %v1408
    %1464 = vmatprep.subr.mxu0 0.0
    %1465 = vmatpush2.msra.mxu0 %v1407
    %1466 = vmatprep.subr.mxu0 0.0
    %1467 = vmatpush2.msra.mxu0 %v1406
    %1468 = vmatprep.subr.mxu0 0.0
    %1469 = vmatpush2.msra.mxu0 %v1405
    %1470 = vmatprep.subr.mxu0 0.0
    %1471 = vmatpush2.msra.mxu0 %v1404
    %1472 = vmatprep.subr.mxu0 0.0
    %1473 = vmatpush2.msra.mxu0 %v1403
    %1474 = vmatprep.subr.mxu0 0.0
    %1475 = vmatpush2.msra.mxu0 %v1402
    %1476 = vmatprep.subr.mxu0 0.0
    %1477 = vmatpush2.msra.mxu0 %v1401
    %1478 = vmatprep.subr.mxu0 0.0
    %1479 = vmatpush2.msra.mxu0 %v1400
    %1480 = vmatprep.mubr.f32.mxu0 %v1351
    %1481 = vmatmul.mubr.f32.gmra.mxu0 %v1350
    %v1482 = vpop.f32.mrf.mxu0
    %v1483 = vadd.f32 0.0, %v1482
    %v1484 = vpop.f32.mrf.mxu0
    %1485 = vdwg.mxu0
    %1486 = vmatprep.subr.mxu0 0.0
    %1487 = vmatpush1.msra.mxu0 %v1367
    %1488 = vmatprep.subr.mxu0 0.0
    %1489 = vmatpush1.msra.mxu0 %v1366
    %1490 = vmatprep.subr.mxu0 0.0
    %1491 = vmatpush1.msra.mxu0 %v1365
    %1492 = vmatprep.subr.mxu0 0.0
    %1493 = vmatpush1.msra.mxu0 %v1364
    %1494 = vmatprep.subr.mxu0 0.0
    %1495 = vmatpush1.msra.mxu0 %v1363
    %1496 = vmatprep.subr.mxu0 0.0
    %1497 = vmatpush1.msra.mxu0 %v1362
    %1498 = vmatprep.subr.mxu0 0.0
    %1499 = vmatpush1.msra.mxu0 %v1361
    %1500 = vmatprep.subr.mxu0 0.0
    %1501 = vmatpush1.msra.mxu0 %v1360
    %1502 = vmatprep.subr.mxu0 0.0
    %1503 = vmatpush1.msra.mxu0 %v1359
    %1504 = vmatprep.subr.mxu0 0.0
    %1505 = vmatpush1.msra.mxu0 %v1358
    %1506 = vmatprep.subr.mxu0 0.0
    %1507 = vmatpush1.msra.mxu0 %v1357
    %1508 = vmatprep.subr.mxu0 0.0
    %1509 = vmatpush1.msra.mxu0 %v1356
    %1510 = vmatprep.subr.mxu0 0.0
    %1511 = vmatpush1.msra.mxu0 %v1355
    %1512 = vmatprep.subr.mxu0 0.0
    %1513 = vmatpush1.msra.mxu0 %v1354
    %1514 = vmatprep.subr.mxu0 0.0
    %1515 = vmatpush1.msra.mxu0 %v1353
    %1516 = vmatprep.subr.mxu0 0.0
    %1517 = vmatpush1.msra.mxu0 %v1352
    %1518 = vmatprep.subr.mxu0 0.0
    %1519 = vmatpush2.msra.mxu0 %v1383
    %1520 = vmatprep.subr.mxu0 0.0
    %1521 = vmatpush2.msra.mxu0 %v1382
    %1522 = vmatprep.subr.mxu0 0.0
    %1523 = vmatpush2.msra.mxu0 %v1381
    %1524 = vmatprep.subr.mxu0 0.0
    %1525 = vmatpush2.msra.mxu0 %v1380
    %1526 = vmatprep.subr.mxu0 0.0
    %1527 = vmatpush2.msra.mxu0 %v1379
    %1528 = vmatprep.subr.mxu0 0.0
    %1529 = vmatpush2.msra.mxu0 %v1378
    %1530 = vmatprep.subr.mxu0 0.0
    %1531 = vmatpush2.msra.mxu0 %v1377
    %1532 = vmatprep.subr.mxu0 0.0
    %1533 = vmatpush2.msra.mxu0 %v1376
    %1534 = vmatprep.subr.mxu0 0.0
    %1535 = vmatpush2.msra.mxu0 %v1375
    %1536 = vmatprep.subr.mxu0 0.0
    %1537 = vmatpush2.msra.mxu0 %v1374
    %1538 = vmatprep.subr.mxu0 0.0
    %1539 = vmatpush2.msra.mxu0 %v1373
    %1540 = vmatprep.subr.mxu0 0.0
    %1541 = vmatpush2.msra.mxu0 %v1372
    %1542 = vmatprep.subr.mxu0 0.0
    %1543 = vmatpush2.msra.mxu0 %v1371
    %1544 = vmatprep.subr.mxu0 0.0
    %1545 = vmatpush2.msra.mxu0 %v1370
    %1546 = vmatprep.subr.mxu0 0.0
    %1547 = vmatpush2.msra.mxu0 %v1369
    %1548 = vmatprep.subr.mxu0 0.0
    %1549 = vmatpush2.msra.mxu0 %v1368
    %1550 = vmatprep.mubr.f32.mxu0 %v1098
    %1551 = vmatmul.mubr.f32.gmra.mxu0 %v1097
    %v1552 = vpop.f32.mrf.mxu0
    %v1553 = vadd.f32 %v1483, %v1552
    %v1554 = vpop.f32.mrf.mxu0
    %1555 = vdwg.mxu0
    %v1556 = vld [vmem:[%s37] sm:$0x1]
    %v1558 = vlaneseq
    %v1559 = vshrl.u32 %v1558, 7
    %v1560 = vsub.s32 0, %v1559
    %v1561 = vrot.slane %v1556, %v1560
    %v1563 = vadd.f32 %v1553, %v1561
    %v1564 = vld [vmem:[%s41] sm:$0x1]
    %v1566 = vlaneseq
    %v1567 = vshrl.u32 %v1566, 7
    %v1568 = vsub.s32 0, %v1567
    %v1569 = vrot.slane %v1564, %v1568
    %v1571 = vadd.f32 %v1563, %v1569
    %v1572 = vmax.f32 %v1571, 0.0
    %v1573 = vld [vmem:[#allocation14] sm:$0xff]
    %v1574 = vld [vmem:[#allocation14 + $0x8] sm:$0xff]
    %v1575 = vld [vmem:[#allocation14 + $0x10] sm:$0xff]
    %v1576 = vld [vmem:[#allocation14 + $0x18] sm:$0xff]
    %v1577 = vld [vmem:[#allocation14 + $0x20] sm:$0xff]
    %v1578 = vld [vmem:[#allocation14 + $0x28] sm:$0xff]
    %v1579 = vld [vmem:[#allocation14 + $0x30] sm:$0xff]
    %v1580 = vld [vmem:[#allocation14 + $0x38] sm:$0xff]
    %v1581 = vld [vmem:[#allocation14 + $0x40] sm:$0xff]
    %v1582 = vld [vmem:[#allocation14 + $0x48] sm:$0xff]
    %v1583 = vld [vmem:[#allocation14 + $0x50] sm:$0xff]
    %v1584 = vld [vmem:[#allocation14 + $0x58] sm:$0xff]
    %v1585 = vld [vmem:[#allocation14 + $0x60] sm:$0xff]
    %v1586 = vld [vmem:[#allocation14 + $0x68] sm:$0xff]
    %v1587 = vld [vmem:[#allocation14 + $0x70] sm:$0xff]
    %v1588 = vld [vmem:[#allocation14 + $0x78] sm:$0xff]
    %v1589 = vld [vmem:[%s45] sm:$0x1]
    %v1591 = vlaneseq
    %v1592 = vshrl.u32 %v1591, 7
    %v1593 = vsub.s32 0, %v1592
    %v1594 = vrot.slane %v1589, %v1593
    %1596 = vmatprep.subr.mxu0 0.0
    %1597 = vmatpush1.msra.mxu0 %v1588
    %1598 = vmatprep.subr.mxu0 0.0
    %1599 = vmatpush1.msra.mxu0 %v1587
    %1600 = vmatprep.subr.mxu0 0.0
    %1601 = vmatpush1.msra.mxu0 %v1586
    %1602 = vmatprep.subr.mxu0 0.0
    %1603 = vmatpush1.msra.mxu0 %v1585
    %1604 = vmatprep.subr.mxu0 0.0
    %1605 = vmatpush1.msra.mxu0 %v1584
    %1606 = vmatprep.subr.mxu0 0.0
    %1607 = vmatpush1.msra.mxu0 %v1583
    %1608 = vmatprep.subr.mxu0 0.0
    %1609 = vmatpush1.msra.mxu0 %v1582
    %1610 = vmatprep.subr.mxu0 0.0
    %1611 = vmatpush1.msra.mxu0 %v1581
    %1612 = vmatprep.subr.mxu0 0.0
    %1613 = vmatpush1.msra.mxu0 %v1580
    %1614 = vmatprep.subr.mxu0 0.0
    %1615 = vmatpush1.msra.mxu0 %v1579
    %1616 = vmatprep.subr.mxu0 0.0
    %1617 = vmatpush1.msra.mxu0 %v1578
    %1618 = vmatprep.subr.mxu0 0.0
    %1619 = vmatpush1.msra.mxu0 %v1577
    %1620 = vmatprep.subr.mxu0 0.0
    %1621 = vmatpush1.msra.mxu0 %v1576
    %1622 = vmatprep.subr.mxu0 0.0
    %1623 = vmatpush1.msra.mxu0 %v1575
    %1624 = vmatprep.subr.mxu0 0.0
    %1625 = vmatpush1.msra.mxu0 %v1574
    %1626 = vmatprep.subr.mxu0 0.0
    %1627 = vmatpush1.msra.mxu0 %v1573
    %1628 = vmatprep.subr.mxu0 0.0
    %1629 = vmatpush2.msra.mxu0 0.0
    %1630 = vmatprep.subr.mxu0 0.0
    %1631 = vmatpush2.msra.mxu0 0.0
    %1632 = vmatprep.subr.mxu0 0.0
    %1633 = vmatpush2.msra.mxu0 0.0
    %1634 = vmatprep.subr.mxu0 0.0
    %1635 = vmatpush2.msra.mxu0 0.0
    %1636 = vmatprep.subr.mxu0 0.0
    %1637 = vmatpush2.msra.mxu0 0.0
    %1638 = vmatprep.subr.mxu0 0.0
    %1639 = vmatpush2.msra.mxu0 0.0
    %1640 = vmatprep.subr.mxu0 0.0
    %1641 = vmatpush2.msra.mxu0 0.0
    %1642 = vmatprep.subr.mxu0 0.0
    %1643 = vmatpush2.msra.mxu0 0.0
    %1644 = vmatprep.subr.mxu0 0.0
    %1645 = vmatpush2.msra.mxu0 0.0
    %1646 = vmatprep.subr.mxu0 0.0
    %1647 = vmatpush2.msra.mxu0 0.0
    %1648 = vmatprep.subr.mxu0 0.0
    %1649 = vmatpush2.msra.mxu0 0.0
    %1650 = vmatprep.subr.mxu0 0.0
    %1651 = vmatpush2.msra.mxu0 0.0
    %1652 = vmatprep.subr.mxu0 0.0
    %1653 = vmatpush2.msra.mxu0 0.0
    %1654 = vmatprep.subr.mxu0 0.0
    %1655 = vmatpush2.msra.mxu0 0.0
    %1656 = vmatprep.subr.mxu0 0.0
    %1657 = vmatpush2.msra.mxu0 0.0
    %1658 = vmatprep.subr.mxu0 0.0
    %1659 = vmatpush2.msra.mxu0 0.0
    %1660 = vmatprep.mubr.f32.mxu0 0.0
    %1661 = vmatmul.mubr.f32.gmra.mxu0 %v1572
    %v1662 = vpop.f32.mrf.mxu0
    %v1663 = vadd.f32 %v1594, %v1662
    %v1664 = vpop.f32.mrf.mxu0
    %1665 = vdwg.mxu0
    %v1666 = vrot.slane %v1663, 4
    %v1667 = vadd.f32 %v1663, %v1666
    %v1668 = vrot.slane %v1667, 2
    %v1669 = vadd.f32 %v1667, %v1668
    %v1670 = vrot.slane %v1669, 1
    %v1671 = vadd.f32 %v1669, %v1670
    %v1672 = vmul.f32 %v1671, %v449
    %v1673 = vsub.f32 %v1663, %v1672
    %v1674 = vmul.f32 %v1673, %v1673
    %v1675 = vrot.slane %v1674, 4
    %v1676 = vadd.f32 %v1674, %v1675
    %v1677 = vrot.slane %v1676, 2
    %v1678 = vadd.f32 %v1676, %v1677
    %v1679 = vrot.slane %v1678, 1
    %v1680 = vadd.f32 %v1678, %v1679
    %v1681 = vmul.f32 %v1680, %v449
    %v1682 = vld [vmem:[%s47] sm:$0x1]
    %v1683 = vadd.f32 %v1681, 1e-05
    %v1684 = vrsqrt.pop %v1683
    %v1685 = vmul.f32 %v1682, %v1684
    %v1686 = vld [vmem:[%s49] sm:$0x1]
    %v1687 = vmul.f32 %v1672, %v1685
    %v1688 = vsub.f32 %v1686, %v1687
    %v1690 = vlaneseq
    %v1691 = vshrl.u32 %v1690, 7
    %v1692 = vsub.s32 0, %v1691
    %v1693 = vrot.slane %v1685, %v1692
    %v1695 = vmul.f32 %v1663, %v1693
    %v1697 = vlaneseq
    %v1698 = vshrl.u32 %v1697, 7
    %v1699 = vsub.s32 0, %v1698
    %v1700 = vrot.slane %v1688, %v1699
    %v1702 = vadd.f32 %v1695, %v1700
    %v1703 = vmax.f32 %v1702, 0.0
    %v1704 = vld [vmem:[#allocation16] sm:$0xff]
    %v1705 = vld [vmem:[#allocation16 + $0x8] sm:$0xff]
    %v1706 = vld [vmem:[#allocation16 + $0x10] sm:$0xff]
    %v1707 = vld [vmem:[#allocation16 + $0x18] sm:$0xff]
    %v1708 = vld [vmem:[#allocation16 + $0x20] sm:$0xff]
    %v1709 = vld [vmem:[#allocation16 + $0x28] sm:$0xff]
    %v1710 = vld [vmem:[#allocation16 + $0x30] sm:$0xff]
    %v1711 = vld [vmem:[#allocation16 + $0x38] sm:$0xff]
    %v1712 = vld [vmem:[#allocation16 + $0x40] sm:$0xff]
    %v1713 = vld [vmem:[#allocation16 + $0x48] sm:$0xff]
    %v1714 = vld [vmem:[#allocation16 + $0x50] sm:$0xff]
    %v1715 = vld [vmem:[#allocation16 + $0x58] sm:$0xff]
    %v1716 = vld [vmem:[#allocation16 + $0x60] sm:$0xff]
    %v1717 = vld [vmem:[#allocation16 + $0x68] sm:$0xff]
    %v1718 = vld [vmem:[#allocation16 + $0x70] sm:$0xff]
    %v1719 = vld [vmem:[#allocation16 + $0x78] sm:$0xff]
    %v1720 = vld [vmem:[%s53] sm:$0x1]
    %v1722 = vlaneseq
    %v1723 = vshrl.u32 %v1722, 7
    %v1724 = vsub.s32 0, %v1723
    %v1725 = vrot.slane %v1720, %v1724
    %1727 = vmatprep.subr.mxu0 0.0
    %1728 = vmatpush1.msra.mxu0 %v1719
    %1729 = vmatprep.subr.mxu0 0.0
    %1730 = vmatpush1.msra.mxu0 %v1718
    %1731 = vmatprep.subr.mxu0 0.0
    %1732 = vmatpush1.msra.mxu0 %v1717
    %1733 = vmatprep.subr.mxu0 0.0
    %1734 = vmatpush1.msra.mxu0 %v1716
    %1735 = vmatprep.subr.mxu0 0.0
    %1736 = vmatpush1.msra.mxu0 %v1715
    %1737 = vmatprep.subr.mxu0 0.0
    %1738 = vmatpush1.msra.mxu0 %v1714
    %1739 = vmatprep.subr.mxu0 0.0
    %1740 = vmatpush1.msra.mxu0 %v1713
    %1741 = vmatprep.subr.mxu0 0.0
    %1742 = vmatpush1.msra.mxu0 %v1712
    %1743 = vmatprep.subr.mxu0 0.0
    %1744 = vmatpush1.msra.mxu0 %v1711
    %1745 = vmatprep.subr.mxu0 0.0
    %1746 = vmatpush1.msra.mxu0 %v1710
    %1747 = vmatprep.subr.mxu0 0.0
    %1748 = vmatpush1.msra.mxu0 %v1709
    %1749 = vmatprep.subr.mxu0 0.0
    %1750 = vmatpush1.msra.mxu0 %v1708
    %1751 = vmatprep.subr.mxu0 0.0
    %1752 = vmatpush1.msra.mxu0 %v1707
    %1753 = vmatprep.subr.mxu0 0.0
    %1754 = vmatpush1.msra.mxu0 %v1706
    %1755 = vmatprep.subr.mxu0 0.0
    %1756 = vmatpush1.msra.mxu0 %v1705
    %1757 = vmatprep.subr.mxu0 0.0
    %1758 = vmatpush1.msra.mxu0 %v1704
    %1759 = vmatprep.subr.mxu0 0.0
    %1760 = vmatpush2.msra.mxu0 0.0
    %1761 = vmatprep.subr.mxu0 0.0
    %1762 = vmatpush2.msra.mxu0 0.0
    %1763 = vmatprep.subr.mxu0 0.0
    %1764 = vmatpush2.msra.mxu0 0.0
    %1765 = vmatprep.subr.mxu0 0.0
    %1766 = vmatpush2.msra.mxu0 0.0
    %1767 = vmatprep.subr.mxu0 0.0
    %1768 = vmatpush2.msra.mxu0 0.0
    %1769 = vmatprep.subr.mxu0 0.0
    %1770 = vmatpush2.msra.mxu0 0.0
    %1771 = vmatprep.subr.mxu0 0.0
    %1772 = vmatpush2.msra.mxu0 0.0
    %1773 = vmatprep.subr.mxu0 0.0
    %1774 = vmatpush2.msra.mxu0 0.0
    %1775 = vmatprep.subr.mxu0 0.0
    %1776 = vmatpush2.msra.mxu0 0.0
    %1777 = vmatprep.subr.mxu0 0.0
    %1778 = vmatpush2.msra.mxu0 0.0
    %1779 = vmatprep.subr.mxu0 0.0
    %1780 = vmatpush2.msra.mxu0 0.0
    %1781 = vmatprep.subr.mxu0 0.0
    %1782 = vmatpush2.msra.mxu0 0.0
    %1783 = vmatprep.subr.mxu0 0.0
    %1784 = vmatpush2.msra.mxu0 0.0
    %1785 = vmatprep.subr.mxu0 0.0
    %1786 = vmatpush2.msra.mxu0 0.0
    %1787 = vmatprep.subr.mxu0 0.0
    %1788 = vmatpush2.msra.mxu0 0.0
    %1789 = vmatprep.subr.mxu0 0.0
    %1790 = vmatpush2.msra.mxu0 0.0
    %1791 = vmatprep.mubr.f32.mxu0 0.0
    %1792 = vmatmul.mubr.f32.gmra.mxu0 %v1703
    %v1793 = vpop.f32.mrf.mxu0
    %v1794 = vadd.f32 %v1725, %v1793
    %v1795 = vpop.f32.mrf.mxu0
    %1796 = vdwg.mxu0
    %v1797 = vadd.f32 %v1572, %v1794
    %v1798 = vmax.f32 %v1797, 0.0
    %v1799 = vld [vmem:[#allocation17] sm:$0xff]
    %v1800 = vld [vmem:[#allocation17 + $0x8] sm:$0xff]
    %v1801 = vld [vmem:[#allocation17 + $0x10] sm:$0xff]
    %v1802 = vld [vmem:[#allocation17 + $0x18] sm:$0xff]
    %v1803 = vld [vmem:[#allocation17 + $0x20] sm:$0xff]
    %v1804 = vld [vmem:[#allocation17 + $0x28] sm:$0xff]
    %v1805 = vld [vmem:[#allocation17 + $0x30] sm:$0xff]
    %v1806 = vld [vmem:[#allocation17 + $0x38] sm:$0xff]
    %v1807 = vld [vmem:[#allocation17 + $0x40] sm:$0xff]
    %v1808 = vld [vmem:[#allocation17 + $0x48] sm:$0xff]
    %v1809 = vld [vmem:[#allocation17 + $0x50] sm:$0xff]
    %v1810 = vld [vmem:[#allocation17 + $0x58] sm:$0xff]
    %v1811 = vld [vmem:[#allocation17 + $0x60] sm:$0xff]
    %v1812 = vld [vmem:[#allocation17 + $0x68] sm:$0xff]
    %v1813 = vld [vmem:[#allocation17 + $0x70] sm:$0xff]
    %v1814 = vld [vmem:[#allocation17 + $0x78] sm:$0xff]
    %v1815 = vld [vmem:[%s57] sm:$0x1]
    %v1817 = vlaneseq
    %v1818 = vshrl.u32 %v1817, 7
    %v1819 = vsub.s32 0, %v1818
    %v1820 = vrot.slane %v1815, %v1819
    %1822 = vmatprep.subr.mxu0 0.0
    %1823 = vmatpush1.msra.mxu0 %v1814
    %1824 = vmatprep.subr.mxu0 0.0
    %1825 = vmatpush1.msra.mxu0 %v1813
    %1826 = vmatprep.subr.mxu0 0.0
    %1827 = vmatpush1.msra.mxu0 %v1812
    %1828 = vmatprep.subr.mxu0 0.0
    %1829 = vmatpush1.msra.mxu0 %v1811
    %1830 = vmatprep.subr.mxu0 0.0
    %1831 = vmatpush1.msra.mxu0 %v1810
    %1832 = vmatprep.subr.mxu0 0.0
    %1833 = vmatpush1.msra.mxu0 %v1809
    %1834 = vmatprep.subr.mxu0 0.0
    %1835 = vmatpush1.msra.mxu0 %v1808
    %1836 = vmatprep.subr.mxu0 0.0
    %1837 = vmatpush1.msra.mxu0 %v1807
    %1838 = vmatprep.subr.mxu0 0.0
    %1839 = vmatpush1.msra.mxu0 %v1806
    %1840 = vmatprep.subr.mxu0 0.0
    %1841 = vmatpush1.msra.mxu0 %v1805
    %1842 = vmatprep.subr.mxu0 0.0
    %1843 = vmatpush1.msra.mxu0 %v1804
    %1844 = vmatprep.subr.mxu0 0.0
    %1845 = vmatpush1.msra.mxu0 %v1803
    %1846 = vmatprep.subr.mxu0 0.0
    %1847 = vmatpush1.msra.mxu0 %v1802
    %1848 = vmatprep.subr.mxu0 0.0
    %1849 = vmatpush1.msra.mxu0 %v1801
    %1850 = vmatprep.subr.mxu0 0.0
    %1851 = vmatpush1.msra.mxu0 %v1800
    %1852 = vmatprep.subr.mxu0 0.0
    %1853 = vmatpush1.msra.mxu0 %v1799
    %1854 = vmatprep.subr.mxu0 0.0
    %1855 = vmatpush2.msra.mxu0 0.0
    %1856 = vmatprep.subr.mxu0 0.0
    %1857 = vmatpush2.msra.mxu0 0.0
    %1858 = vmatprep.subr.mxu0 0.0
    %1859 = vmatpush2.msra.mxu0 0.0
    %1860 = vmatprep.subr.mxu0 0.0
    %1861 = vmatpush2.msra.mxu0 0.0
    %1862 = vmatprep.subr.mxu0 0.0
    %1863 = vmatpush2.msra.mxu0 0.0
    %1864 = vmatprep.subr.mxu0 0.0
    %1865 = vmatpush2.msra.mxu0 0.0
    %1866 = vmatprep.subr.mxu0 0.0
    %1867 = vmatpush2.msra.mxu0 0.0
    %1868 = vmatprep.subr.mxu0 0.0
    %1869 = vmatpush2.msra.mxu0 0.0
    %1870 = vmatprep.subr.mxu0 0.0
    %1871 = vmatpush2.msra.mxu0 0.0
    %1872 = vmatprep.subr.mxu0 0.0
    %1873 = vmatpush2.msra.mxu0 0.0
    %1874 = vmatprep.subr.mxu0 0.0
    %1875 = vmatpush2.msra.mxu0 0.0
    %1876 = vmatprep.subr.mxu0 0.0
    %1877 = vmatpush2.msra.mxu0 0.0
    %1878 = vmatprep.subr.mxu0 0.0
    %1879 = vmatpush2.msra.mxu0 0.0
    %1880 = vmatprep.subr.mxu0 0.0
    %1881 = vmatpush2.msra.mxu0 0.0
    %1882 = vmatprep.subr.mxu0 0.0
    %1883 = vmatpush2.msra.mxu0 0.0
    %1884 = vmatprep.subr.mxu0 0.0
    %1885 = vmatpush2.msra.mxu0 0.0
    %1886 = vmatprep.mubr.f32.mxu0 0.0
    %1887 = vmatmul.mubr.f32.gmra.mxu0 %v1798
    %v1888 = vpop.f32.mrf.mxu0
    %v1889 = vadd.f32 %v1820, %v1888
    %v1890 = vpop.f32.mrf.mxu0
    %1891 = vdwg.mxu0
    %v1892 = vrot.slane %v1889, 4
    %v1893 = vadd.f32 %v1889, %v1892
    %v1894 = vrot.slane %v1893, 2
    %v1895 = vadd.f32 %v1893, %v1894
    %v1896 = vrot.slane %v1895, 1
    %v1897 = vadd.f32 %v1895, %v1896
    %v1898 = vmul.f32 %v1897, %v449
    %v1899 = vsub.f32 %v1889, %v1898
    %v1900 = vmul.f32 %v1899, %v1899
    %v1901 = vrot.slane %v1900, 4
    %v1902 = vadd.f32 %v1900, %v1901
    %v1903 = vrot.slane %v1902, 2
    %v1904 = vadd.f32 %v1902, %v1903
    %v1905 = vrot.slane %v1904, 1
    %v1906 = vadd.f32 %v1904, %v1905
    %v1907 = vmul.f32 %v1906, %v449
    %v1908 = vld [vmem:[%s59] sm:$0x1]
    %v1909 = vadd.f32 %v1907, 1e-05
    %v1910 = vrsqrt.pop %v1909
    %v1911 = vmul.f32 %v1908, %v1910
    %v1912 = vld [vmem:[%s61] sm:$0x1]
    %v1913 = vmul.f32 %v1898, %v1911
    %v1914 = vsub.f32 %v1912, %v1913
    %v1916 = vlaneseq
    %v1917 = vshrl.u32 %v1916, 7
    %v1918 = vsub.s32 0, %v1917
    %v1919 = vrot.slane %v1911, %v1918
    %v1921 = vmul.f32 %v1889, %v1919
    %v1923 = vlaneseq
    %v1924 = vshrl.u32 %v1923, 7
    %v1925 = vsub.s32 0, %v1924
    %v1926 = vrot.slane %v1914, %v1925
    %v1928 = vadd.f32 %v1921, %v1926
    %v1929 = vmax.f32 %v1928, 0.0
    %v1930 = vld [vmem:[#allocation19] sm:$0xff]
    %v1931 = vld [vmem:[#allocation19 + $0x8] sm:$0xff]
    %v1932 = vld [vmem:[#allocation19 + $0x10] sm:$0xff]
    %v1933 = vld [vmem:[#allocation19 + $0x18] sm:$0xff]
    %v1934 = vld [vmem:[#allocation19 + $0x20] sm:$0xff]
    %v1935 = vld [vmem:[#allocation19 + $0x28] sm:$0xff]
    %v1936 = vld [vmem:[#allocation19 + $0x30] sm:$0xff]
    %v1937 = vld [vmem:[#allocation19 + $0x38] sm:$0xff]
    %v1938 = vld [vmem:[#allocation19 + $0x40] sm:$0xff]
    %v1939 = vld [vmem:[#allocation19 + $0x48] sm:$0xff]
    %v1940 = vld [vmem:[#allocation19 + $0x50] sm:$0xff]
    %v1941 = vld [vmem:[#allocation19 + $0x58] sm:$0xff]
    %v1942 = vld [vmem:[#allocation19 + $0x60] sm:$0xff]
    %v1943 = vld [vmem:[#allocation19 + $0x68] sm:$0xff]
    %v1944 = vld [vmem:[#allocation19 + $0x70] sm:$0xff]
    %v1945 = vld [vmem:[#allocation19 + $0x78] sm:$0xff]
    %v1946 = vld [vmem:[%s65] sm:$0x1]
    %v1948 = vlaneseq
    %v1949 = vshrl.u32 %v1948, 7
    %v1950 = vsub.s32 0, %v1949
    %v1951 = vrot.slane %v1946, %v1950
    %1953 = vmatprep.subr.mxu0 0.0
    %1954 = vmatpush1.msra.mxu0 %v1945
    %1955 = vmatprep.subr.mxu0 0.0
    %1956 = vmatpush1.msra.mxu0 %v1944
    %1957 = vmatprep.subr.mxu0 0.0
    %1958 = vmatpush1.msra.mxu0 %v1943
    %1959 = vmatprep.subr.mxu0 0.0
    %1960 = vmatpush1.msra.mxu0 %v1942
    %1961 = vmatprep.subr.mxu0 0.0
    %1962 = vmatpush1.msra.mxu0 %v1941
    %1963 = vmatprep.subr.mxu0 0.0
    %1964 = vmatpush1.msra.mxu0 %v1940
    %1965 = vmatprep.subr.mxu0 0.0
    %1966 = vmatpush1.msra.mxu0 %v1939
    %1967 = vmatprep.subr.mxu0 0.0
    %1968 = vmatpush1.msra.mxu0 %v1938
    %1969 = vmatprep.subr.mxu0 0.0
    %1970 = vmatpush1.msra.mxu0 %v1937
    %1971 = vmatprep.subr.mxu0 0.0
    %1972 = vmatpush1.msra.mxu0 %v1936
    %1973 = vmatprep.subr.mxu0 0.0
    %1974 = vmatpush1.msra.mxu0 %v1935
    %1975 = vmatprep.subr.mxu0 0.0
    %1976 = vmatpush1.msra.mxu0 %v1934
    %1977 = vmatprep.subr.mxu0 0.0
    %1978 = vmatpush1.msra.mxu0 %v1933
    %1979 = vmatprep.subr.mxu0 0.0
    %1980 = vmatpush1.msra.mxu0 %v1932
    %1981 = vmatprep.subr.mxu0 0.0
    %1982 = vmatpush1.msra.mxu0 %v1931
    %1983 = vmatprep.subr.mxu0 0.0
    %1984 = vmatpush1.msra.mxu0 %v1930
    %1985 = vmatprep.subr.mxu0 0.0
    %1986 = vmatpush2.msra.mxu0 0.0
    %1987 = vmatprep.subr.mxu0 0.0
    %1988 = vmatpush2.msra.mxu0 0.0
    %1989 = vmatprep.subr.mxu0 0.0
    %1990 = vmatpush2.msra.mxu0 0.0
    %1991 = vmatprep.subr.mxu0 0.0
    %1992 = vmatpush2.msra.mxu0 0.0
    %1993 = vmatprep.subr.mxu0 0.0
    %1994 = vmatpush2.msra.mxu0 0.0
    %1995 = vmatprep.subr.mxu0 0.0
    %1996 = vmatpush2.msra.mxu0 0.0
    %1997 = vmatprep.subr.mxu0 0.0
    %1998 = vmatpush2.msra.mxu0 0.0
    %1999 = vmatprep.subr.mxu0 0.0
    %2000 = vmatpush2.msra.mxu0 0.0
    %2001 = vmatprep.subr.mxu0 0.0
    %2002 = vmatpush2.msra.mxu0 0.0
    %2003 = vmatprep.subr.mxu0 0.0
    %2004 = vmatpush2.msra.mxu0 0.0
    %2005 = vmatprep.subr.mxu0 0.0
    %2006 = vmatpush2.msra.mxu0 0.0
    %2007 = vmatprep.subr.mxu0 0.0
    %2008 = vmatpush2.msra.mxu0 0.0
    %2009 = vmatprep.subr.mxu0 0.0
    %2010 = vmatpush2.msra.mxu0 0.0
    %2011 = vmatprep.subr.mxu0 0.0
    %2012 = vmatpush2.msra.mxu0 0.0
    %2013 = vmatprep.subr.mxu0 0.0
    %2014 = vmatpush2.msra.mxu0 0.0
    %2015 = vmatprep.subr.mxu0 0.0
    %2016 = vmatpush2.msra.mxu0 0.0
    %2017 = vmatprep.mubr.f32.mxu0 0.0
    %2018 = vmatmul.mubr.f32.gmra.mxu0 %v1929
    %v2019 = vpop.f32.mrf.mxu0
    %v2020 = vadd.f32 %v1951, %v2019
    %v2021 = vpop.f32.mrf.mxu0
    %2022 = vdwg.mxu0
    %v2023 = vadd.f32 %v1798, %v2020
    %v2024 = vmax.f32 %v2023, 0.0
    %2025 = vst [vmem:[#allocation20] sm:$0xff] %v2024
    // Predicated region
    $region178: #{unroll_net_forward.1} parent=1 // pred_check
      _
    $region179: #{unroll_net_forward.1} parent=1 // pred_check_branch
      %2027 = sbr.rel (0) target = $region181
    $region180: #{unroll_net_forward.1} parent=1 // pred_region
      %s2029 = ssub.s32 128, 128
      %2030 = vsyncadd [#allocation4], %s2029
      %s2032 = sshll.u32 [#allocation20], 4
      %s2033 = int_to_ptr.vmem [resolvable:$true] %s2032
      %2035 = dma.vmem_to_hbm [thread:$0]  %s2033, 128, %s67, [#allocation4]
    $region181: #{unroll_net_forward.1} parent=1 // pred_fallthru
      _
    // Predicated region
    $region182: #{unroll_net_forward.1} parent=1 // pred_check
      _
    $region183: #{unroll_net_forward.1} parent=1 // pred_check_branch
      %2037 = sbr.rel (0) target = $region185
    $region184: #{unroll_net_forward.1} parent=1 // pred_region
      %2038 = dma.done [#allocation4], 128
    $region185: #{unroll_net_forward.1} parent=1 // pred_fallthru
      _
    %2039 = vsyncpa [#allocation3], 1
    %2040 = vsyncpa [#allocation6], 1
    %2041 = vsyncpa [#allocation9], 1
    %2042 = vsyncpa [#allocation12], 1
    %2043 = vsyncpa [#allocation15], 1
    %2044 = vsyncpa [#allocation18], 1
    %2045 = vsyncpa [#allocation4], 1

</llo_original>
